<compile_context>
chip_gen: v6e
topology: v6e:2x2x1
jax: 0.10.0
libtpu: 0.0.40
codegen_flags: <defaults>
</compile_context>

<pallas_src>
from functools import partial

import jax
import jax.numpy as jnp
import numpy as np
from jax.experimental import pallas as pl
from jax.experimental.pallas import tpu as pltpu


def _expanding_block_kernel(x_ref, w_ref, b_ref, o_ref, *, H, W, Cout,
                            use_inorm, activation, eps=1e-5):
    # x_ref : (1, H+1, W+1, Cin)  bf16  zero-padded NHWC input (pad bottom/right by 1)
    # w_ref : (4, Cin, 4*Cout)    bf16  per-tap weights; columns = parity blocks [ee|eo|oe|oo]
    # b_ref : (1, 4*Cout)         f32   bias tiled over the 4 parity blocks (no-norm path only)
    # o_ref : (1, H*W, 4*Cout)    f32   output, parity-major channel blocks
    HW = H * W
    xp = x_ref[0]                                   # (H+1, W+1, Cin) in VMEM

    # Build the four shifted taps in VMEM (no extra HBM traffic).
    x00 = xp[:H, :W, :].reshape(HW, -1)             # x[i,   j  ]
    x01 = xp[:H, 1:, :].reshape(HW, -1)             # x[i,   j+1]
    x10 = xp[1:, :W, :].reshape(HW, -1)             # x[i+1, j  ]
    x11 = xp[1:, 1:, :].reshape(HW, -1)             # x[i+1, j+1]

    y = jnp.dot(x00, w_ref[0], preferred_element_type=jnp.float32)
    y = y + jnp.dot(x01, w_ref[1], preferred_element_type=jnp.float32)
    y = y + jnp.dot(x10, w_ref[2], preferred_element_type=jnp.float32)
    y = y + jnp.dot(x11, w_ref[3], preferred_element_type=jnp.float32)

    if use_inorm:
        # Bias is exactly cancelled by the mean subtraction -> skip the add.
        # One-pass statistics, folded over the 4 parity blocks (all f32).
        n_el = jnp.float32(4 * HW)
        s1 = jnp.sum(y, axis=0, keepdims=True)       # (1, 4*Cout)
        s2 = jnp.sum(y * y, axis=0, keepdims=True)   # (1, 4*Cout)

        def fold(v):  # (1, 4*Cout) -> (1, Cout): sum the 4 parity blocks
            return (v[:, 0:Cout] + v[:, Cout:2 * Cout]
                    + v[:, 2 * Cout:3 * Cout] + v[:, 3 * Cout:4 * Cout])

        mean = fold(s1) / n_el
        var = fold(s2) / n_el - mean * mean          # biased variance (PyTorch InstanceNorm)
        inv = jax.lax.rsqrt(var + eps)
        shift = jnp.concatenate([mean, mean, mean, mean], axis=1)   # (1, 4*Cout)
        scale = jnp.concatenate([inv, inv, inv, inv], axis=1)
        y = (y - shift) * scale
    else:
        y = y + b_ref[...]

    if activation == 'relu':
        y = jnp.maximum(y, 0.0)
    elif activation == 'leakyrelu':
        # Module passes slope 0.2 explicitly (PyTorch default would be 0.01).
        y = jnp.where(y > 0, y, 0.2 * y)

    o_ref[0] = y.astype(o_ref.dtype)


def expanding_block(x_nchw, weight, bias, use_inorm=True, activation='relu'):
    """weight: (Cin, Cout, 3, 3) as in torch.nn.ConvTranspose2d; bias: (Cout,). Returns NCHW."""
    N, Cin, H, W = x_nchw.shape
    Cout = weight.shape[1]
    HW = H * W

    # ---- glue (single fused pass): NCHW -> NHWC, pad bottom/right by 1, cast bf16 ----
    xp = jnp.transpose(x_nchw, (0, 2, 3, 1))
    xp = jnp.pad(xp, ((0, 0), (0, 1), (0, 1), (0, 0))).astype(jnp.bfloat16)

    # ---- glue: pack the 9 taps into 4 per-tap (Cin, 4*Cout) matrices ----
    # Output parity decomposition (stride=2, k=3, pad=1, out_pad=1):
    #   y[2i,   2j  ] = x00 @ w[1,1]
    #   y[2i,   2j+1] = x00 @ w[1,2] + x01 @ w[1,0]
    #   y[2i+1, 2j  ] = x00 @ w[2,1] + x10 @ w[0,1]
    #   y[2i+1, 2j+1] = x00 @ w[2,2] + x01 @ w[2,0] + x10 @ w[0,2] + x11 @ w[0,0]
    wt = lambda kh, kw: weight[:, :, kh, kw].astype(jnp.float32)       # (Cin, Cout)
    Z = jnp.zeros((Cin, Cout), jnp.float32)
    w_tap = jnp.stack([
        jnp.concatenate([wt(1, 1), wt(1, 2), wt(2, 1), wt(2, 2)], axis=1),  # tap x00
        jnp.concatenate([Z,        wt(1, 0), Z,        wt(2, 0)], axis=1),  # tap x01
        jnp.concatenate([Z,        Z,        wt(0, 1), wt(0, 2)], axis=1),  # tap x10
        jnp.concatenate([Z,        Z,        Z,        wt(0, 0)], axis=1),  # tap x11
    ]).astype(jnp.bfloat16)                                                 # (4, Cin, 4*Cout)
    bbig = jnp.tile(bias.astype(jnp.float32), 4)[None, :]                   # (1, 4*Cout)

    # ---- explicit VMEM budget: double-buffered in/out blocks + weights + headroom ----
    in_blk = (H + 1) * (W + 1) * Cin * 2
    out_blk = HW * 4 * Cout * 4
    w_bytes = 4 * Cin * 4 * Cout * 2 + 4 * Cout * 4
    vmem_limit = int(min(max(2 * (in_blk + out_blk) + w_bytes + (4 << 20), 32 << 20), 64 << 20))

    out = pl.pallas_call(
        partial(_expanding_block_kernel, H=H, W=W, Cout=Cout,
                use_inorm=use_inorm, activation=activation),
        out_shape=jax.ShapeDtypeStruct((N, HW, 4 * Cout), jnp.float32),
        grid_spec=pltpu.PrefetchScalarGridSpec(
            num_scalar_prefetch=0,
            grid=(N,),
            in_specs=[
                pl.BlockSpec((1, H + 1, W + 1, Cin), lambda n: (n, 0, 0, 0)),
                pl.BlockSpec((4, Cin, 4 * Cout), lambda n: (0, 0, 0)),
                pl.BlockSpec((1, 4 * Cout), lambda n: (0, 0)),
            ],
            out_specs=pl.BlockSpec((1, HW, 4 * Cout), lambda n: (n, 0, 0)),
        ),
        compiler_params=pltpu.CompilerParams(
            dimension_semantics=("parallel",),
            vmem_limit_bytes=vmem_limit,
        ),
    )(xp, w_tap, bbig)

    # ---- glue: un-interleave parity blocks -> NCHW (single transpose pass) ----
    out = out.reshape(N, H, W, 2, 2, Cout)        # (n, i, j, a, b, c)
    out = out.transpose(0, 5, 1, 3, 2, 4)         # (n, c, i, a, j, b)
    return out.reshape(N, Cout, 2 * H, 2 * W)


def ref_forward(x_nchw, weight, bias, use_inorm=True, activation='relu', eps=1e-5):
    """Pure-JAX reference (scatter-form ConvTranspose2d). Conv operands bf16-rounded
    to match the kernel's bf16 MXU feed; accumulation and norm in f32."""
    N, Cin, H, W = x_nchw.shape
    Cout = weight.shape[1]
    xb = x_nchw.astype(jnp.bfloat16).astype(jnp.float32)
    wb = weight.astype(jnp.bfloat16).astype(jnp.float32)
    yfull = jnp.zeros((N, Cout, 2 * H + 1, 2 * W + 1), jnp.float32)
    for kh in range(3):
        for kw in range(3):
            contrib = jnp.einsum('nchw,cd->ndhw', xb, wb[:, :, kh, kw])
            yfull = yfull.at[:, :, kh:kh + 2 * H:2, kw:kw + 2 * W:2].add(contrib)
    y = yfull[:, :, 1:1 + 2 * H, 1:1 + 2 * W] + bias[None, :, None, None]
    if use_inorm:
        mean = y.mean(axis=(2, 3), keepdims=True)
        var = y.var(axis=(2, 3), keepdims=True)
        y = (y - mean) * jax.lax.rsqrt(var + eps)
    if activation == 'relu':
        y = jnp.maximum(y, 0.0)
    elif activation == 'leakyrelu':
        y = jnp.where(y > 0, y, 0.2 * y)
    return y


if __name__ == "__main__":
    key = jax.random.PRNGKey(0)
    k1, k2, k3 = jax.random.split(key, 3)

    N, Cin, H, W = 2, 4, 16, 16
    Cout = Cin // 2

    x = jax.random.normal(k1, (N, Cin, H, W), jnp.float32)
    weight = jax.random.normal(k2, (Cin, Cout, 3, 3), jnp.float32) * 0.2   # ConvTranspose2d weight
    bias = jax.random.normal(k3, (Cout,), jnp.float32) * 0.1

    out = expanding_block(x, weight, bias, use_inorm=True, activation='relu')
    out = jax.block_until_ready(out)

    assert out.shape == (N, Cout, 2 * H, 2 * W), out.shape
    ref = jax.block_until_ready(ref_forward(x, weight, bias))
    np.testing.assert_allclose(np.asarray(out), np.asarray(ref), atol=1e-3, rtol=1e-3)

    print("KERNEL_OK")
</pallas_src>

<mosaic_0001>
module attributes {stable_mosaic.version = 11 : i64} {
  func.func @_expanding_block_kernel(%arg0: i32, %arg1: memref<1x17x17x4xbf16, #tpu.memory_space<vmem>>, %arg2: memref<4x4x8xbf16, #tpu.memory_space<vmem>>, %arg3: memref<1x8xf32, #tpu.memory_space<vmem>>, %arg4: memref<1x256x8xf32, #tpu.memory_space<vmem>>) attributes {dimension_semantics = [#tpu.dimension_semantics<parallel>], iteration_bounds = array<i64: 2>, scalar_prefetch = 0 : i64, scratch_operands = 0 : i64, tpu.core_type = #tpu.core_type<tc>, window_params = [{transform_indices = @transform_0, window_bounds = array<i64: 1, 17, 17, 4>}, {pipeline_mode = #tpu.pipeline_mode<synchronous>, transform_indices = @transform_1, window_bounds = array<i64: 4, 4, 8>}, {pipeline_mode = #tpu.pipeline_mode<synchronous>, transform_indices = @transform_2, window_bounds = array<i64: 1, 8>}, {transform_indices = @transform_3, window_bounds = array<i64: 1, 256, 8>}]} {
    %c0 = arith.constant 0 : index
    %c0_0 = arith.constant 0 : index
    %c0_1 = arith.constant 0 : index
    %c0_2 = arith.constant 0 : index
    %0 = vector.load %arg1[%c0, %c0_0, %c0_1, %c0_2] : memref<1x17x17x4xbf16, #tpu.memory_space<vmem>>, vector<1x17x17x4xbf16>
    %1 = vector.shape_cast %0 : vector<1x17x17x4xbf16> to vector<17x17x4xbf16>
    %2 = vector.extract_strided_slice %1 {offsets = [0, 0, 0], sizes = [16, 16, 4], strides = [1, 1, 1]} : vector<17x17x4xbf16> to vector<16x16x4xbf16>
    %3 = vector.shape_cast %2 : vector<16x16x4xbf16> to vector<256x4xbf16>
    %4 = vector.extract_strided_slice %1 {offsets = [0, 1, 0], sizes = [16, 16, 4], strides = [1, 1, 1]} : vector<17x17x4xbf16> to vector<16x16x4xbf16>
    %5 = vector.shape_cast %4 : vector<16x16x4xbf16> to vector<256x4xbf16>
    %6 = vector.extract_strided_slice %1 {offsets = [1, 0, 0], sizes = [16, 16, 4], strides = [1, 1, 1]} : vector<17x17x4xbf16> to vector<16x16x4xbf16>
    %7 = vector.shape_cast %6 : vector<16x16x4xbf16> to vector<256x4xbf16>
    %8 = vector.extract_strided_slice %1 {offsets = [1, 1, 0], sizes = [16, 16, 4], strides = [1, 1, 1]} : vector<17x17x4xbf16> to vector<16x16x4xbf16>
    %9 = vector.shape_cast %8 : vector<16x16x4xbf16> to vector<256x4xbf16>
    %c0_3 = arith.constant 0 : index
    %c0_4 = arith.constant 0 : index
    %c0_5 = arith.constant 0 : index
    %10 = vector.load %arg2[%c0_3, %c0_4, %c0_5] : memref<4x4x8xbf16, #tpu.memory_space<vmem>>, vector<1x4x8xbf16>
    %11 = vector.shape_cast %10 : vector<1x4x8xbf16> to vector<4x8xbf16>
    %cst = arith.constant dense<0.000000e+00> : vector<256x8xf32>
    %12 = tpu.matmul %3, %11, %cst {dimension_numbers = #tpu.dot_dimension_numbers<[1], [0], [0], [1], [0, 0, 1, 1], [], []>} : vector<256x4xbf16>, vector<4x8xbf16>, vector<256x8xf32> -> vector<256x8xf32>
    %c1 = arith.constant 1 : index
    %c0_6 = arith.constant 0 : index
    %c0_7 = arith.constant 0 : index
    %13 = vector.load %arg2[%c1, %c0_6, %c0_7] : memref<4x4x8xbf16, #tpu.memory_space<vmem>>, vector<1x4x8xbf16>
    %14 = vector.shape_cast %13 : vector<1x4x8xbf16> to vector<4x8xbf16>
    %cst_8 = arith.constant dense<0.000000e+00> : vector<256x8xf32>
    %15 = tpu.matmul %5, %14, %cst_8 {dimension_numbers = #tpu.dot_dimension_numbers<[1], [0], [0], [1], [0, 0, 1, 1], [], []>} : vector<256x4xbf16>, vector<4x8xbf16>, vector<256x8xf32> -> vector<256x8xf32>
    %16 = arith.addf %12, %15 : vector<256x8xf32>
    %c2 = arith.constant 2 : index
    %c0_9 = arith.constant 0 : index
    %c0_10 = arith.constant 0 : index
    %17 = vector.load %arg2[%c2, %c0_9, %c0_10] : memref<4x4x8xbf16, #tpu.memory_space<vmem>>, vector<1x4x8xbf16>
    %18 = vector.shape_cast %17 : vector<1x4x8xbf16> to vector<4x8xbf16>
    %cst_11 = arith.constant dense<0.000000e+00> : vector<256x8xf32>
    %19 = tpu.matmul %7, %18, %cst_11 {dimension_numbers = #tpu.dot_dimension_numbers<[1], [0], [0], [1], [0, 0, 1, 1], [], []>} : vector<256x4xbf16>, vector<4x8xbf16>, vector<256x8xf32> -> vector<256x8xf32>
    %20 = arith.addf %16, %19 : vector<256x8xf32>
    %c3 = arith.constant 3 : index
    %c0_12 = arith.constant 0 : index
    %c0_13 = arith.constant 0 : index
    %21 = vector.load %arg2[%c3, %c0_12, %c0_13] : memref<4x4x8xbf16, #tpu.memory_space<vmem>>, vector<1x4x8xbf16>
    %22 = vector.shape_cast %21 : vector<1x4x8xbf16> to vector<4x8xbf16>
    %cst_14 = arith.constant dense<0.000000e+00> : vector<256x8xf32>
    %23 = tpu.matmul %9, %22, %cst_14 {dimension_numbers = #tpu.dot_dimension_numbers<[1], [0], [0], [1], [0, 0, 1, 1], [], []>} : vector<256x4xbf16>, vector<4x8xbf16>, vector<256x8xf32> -> vector<256x8xf32>
    %24 = arith.addf %20, %23 : vector<256x8xf32>
    %cst_15 = arith.constant dense<0.000000e+00> : vector<8xf32>
    %25 = vector.multi_reduction <add>, %24, %cst_15 [0] : vector<256x8xf32> to vector<8xf32>
    %26 = vector.shape_cast %25 : vector<8xf32> to vector<1x8xf32>
    %27 = arith.mulf %24, %24 : vector<256x8xf32>
    %cst_16 = arith.constant dense<0.000000e+00> : vector<8xf32>
    %28 = vector.multi_reduction <add>, %27, %cst_16 [0] : vector<256x8xf32> to vector<8xf32>
    %29 = vector.shape_cast %28 : vector<8xf32> to vector<1x8xf32>
    %30 = vector.extract_strided_slice %26 {offsets = [0, 0], sizes = [1, 2], strides = [1, 1]} : vector<1x8xf32> to vector<1x2xf32>
    %31 = vector.extract_strided_slice %26 {offsets = [0, 2], sizes = [1, 2], strides = [1, 1]} : vector<1x8xf32> to vector<1x2xf32>
    %32 = arith.addf %30, %31 : vector<1x2xf32>
    %33 = vector.extract_strided_slice %26 {offsets = [0, 4], sizes = [1, 2], strides = [1, 1]} : vector<1x8xf32> to vector<1x2xf32>
    %34 = arith.addf %32, %33 : vector<1x2xf32>
    %35 = vector.extract_strided_slice %26 {offsets = [0, 6], sizes = [1, 2], strides = [1, 1]} : vector<1x8xf32> to vector<1x2xf32>
    %36 = arith.addf %34, %35 : vector<1x2xf32>
    %cst_17 = arith.constant 1.024000e+03 : f32
    %37 = vector.broadcast %cst_17 : f32 to vector<1x2xf32>
    %38 = arith.divf %36, %37 : vector<1x2xf32>
    %39 = vector.extract_strided_slice %29 {offsets = [0, 0], sizes = [1, 2], strides = [1, 1]} : vector<1x8xf32> to vector<1x2xf32>
    %40 = vector.extract_strided_slice %29 {offsets = [0, 2], sizes = [1, 2], strides = [1, 1]} : vector<1x8xf32> to vector<1x2xf32>
    %41 = arith.addf %39, %40 : vector<1x2xf32>
    %42 = vector.extract_strided_slice %29 {offsets = [0, 4], sizes = [1, 2], strides = [1, 1]} : vector<1x8xf32> to vector<1x2xf32>
    %43 = arith.addf %41, %42 : vector<1x2xf32>
    %44 = vector.extract_strided_slice %29 {offsets = [0, 6], sizes = [1, 2], strides = [1, 1]} : vector<1x8xf32> to vector<1x2xf32>
    %45 = arith.addf %43, %44 : vector<1x2xf32>
    %cst_18 = arith.constant 1.024000e+03 : f32
    %46 = vector.broadcast %cst_18 : f32 to vector<1x2xf32>
    %47 = arith.divf %45, %46 : vector<1x2xf32>
    %48 = arith.mulf %38, %38 : vector<1x2xf32>
    %49 = arith.subf %47, %48 : vector<1x2xf32>
    %cst_19 = arith.constant 9.99999974E-6 : f32
    %50 = vector.broadcast %cst_19 : f32 to vector<1x2xf32>
    %51 = arith.addf %49, %50 : vector<1x2xf32>
    %52 = math.rsqrt %51 : vector<1x2xf32>
    %53 = tpu.concatenate %38, %38, %38, %38 in 1 : vector<1x2xf32>, vector<1x2xf32>, vector<1x2xf32>, vector<1x2xf32> -> vector<1x8xf32>
    %54 = tpu.concatenate %52, %52, %52, %52 in 1 : vector<1x2xf32>, vector<1x2xf32>, vector<1x2xf32>, vector<1x2xf32> -> vector<1x8xf32>
    %55 = vector.broadcast %53 : vector<1x8xf32> to vector<256x8xf32>
    %56 = arith.subf %24, %55 : vector<256x8xf32>
    %57 = vector.broadcast %54 : vector<1x8xf32> to vector<256x8xf32>
    %58 = arith.mulf %56, %57 : vector<256x8xf32>
    %cst_20 = arith.constant 0.000000e+00 : f32
    %59 = vector.broadcast %cst_20 : f32 to vector<256x8xf32>
    %60 = arith.maximumf %58, %59 : vector<256x8xf32>
    %c0_21 = arith.constant 0 : index
    %c0_22 = arith.constant 0 : index
    %c0_23 = arith.constant 0 : index
    %61 = vector.load %arg4[%c0_21, %c0_22, %c0_23] : memref<1x256x8xf32, #tpu.memory_space<vmem>>, vector<1x256x8xf32>
    %62 = vector.shape_cast %61 : vector<1x256x8xf32> to vector<256x8xf32>
    %63 = vector.shape_cast %60 : vector<256x8xf32> to vector<1x256x8xf32>
    tpu.vector_store %arg4[%c0_21, %c0_22, %c0_23], %63 {strides = array<i32>} : memref<1x256x8xf32, #tpu.memory_space<vmem>>, vector<1x256x8xf32>,
    return
  }
  func.func @transform_0(%arg0: i32) -> (i32, i32, i32, i32) {
    %c0_i32 = arith.constant 0 : i32
    %c0_i32_0 = arith.constant 0 : i32
    %c0_i32_1 = arith.constant 0 : i32
    %c0_i32_2 = arith.constant 0 : i32
    return %arg0, %c0_i32, %c0_i32_0, %c0_i32_1 : i32, i32, i32, i32
  }
  func.func @transform_1(%arg0: i32) -> (i32, i32, i32) {
    %c0_i32 = arith.constant 0 : i32
    %c0_i32_0 = arith.constant 0 : i32
    %c0_i32_1 = arith.constant 0 : i32
    %c0_i32_2 = arith.constant 0 : i32
    return %c0_i32, %c0_i32_0, %c0_i32_1 : i32, i32, i32
  }
  func.func @transform_2(%arg0: i32) -> (i32, i32) {
    %c0_i32 = arith.constant 0 : i32
    %c0_i32_0 = arith.constant 0 : i32
    %c0_i32_1 = arith.constant 0 : i32
    return %c0_i32, %c0_i32_0 : i32, i32
  }
  func.func @transform_3(%arg0: i32) -> (i32, i32, i32) {
    %c0_i32 = arith.constant 0 : i32
    %c0_i32_0 = arith.constant 0 : i32
    %c0_i32_1 = arith.constant 0 : i32
    return %arg0, %c0_i32, %c0_i32_0 : i32, i32, i32
  }
}

</mosaic_0001>

<llo_original>
// kernel: tpu_custom_call.1
$region0: #{tpu_custom_call.1}
  #allocation0 [shape = 'u32[]', space=smem, size = 0x4, offset = 0x4, fixed_abs, tag = 'smem constant byte address 0x4 - core index']
  #allocation1 [shape = 'u32[144,128]{1,0:T(1,128)}', space=vmem, size = 0x12000, scoped, tag = 'internal scratch']
  %s0 = inlined_call_operand.vmem [shape: bf16[2,17,17,4], index: 0, kind: input, shape index: {}]
  %s1 = inlined_call_operand.vmem [shape: bf16[4,4,8], index: 1, kind: input, shape index: {}]
  %s2 = inlined_call_operand.vmem [shape: f32[1,8], index: 2, kind: input, shape index: {}]
  %s3 = inlined_call_operand.vmem [shape: f32[2,256,8], index: 3, kind: output, shape index: {}]
  %s4 = sld [smem:[#allocation0]]
  $region45: #{tpu_custom_call.1} parent=0
    _
  %s6 = ssub.s32 1, %s4
  %s7 = scalar_select 0, %s6, %s4
  loop: start=0, step=1, limit=4
  $region2: #{tpu_custom_call.1} parent=0 // loop_pre_header
    _
  $region3: #{tpu_custom_call.1} parent=0 // loop_header
    %s9 = sphi 0, %s13
    %p10 = scmp.ge.s32.totalorder %s9, 4
    %s19 = sphi 0, %s21
    %s22 = sphi 0, %s19
    %s23 = sphi 0, %s22
    %s39 = sphi 0, %s23
    %s43 = sphi 0, %s43
    %s45 = sphi 0, %s43
    %s46 = sphi 0, %s45
    %s60 = sphi 0, %s46
    %s64 = sphi 0, %s64
    %s66 = sphi 0, %s64
    %s67 = sphi 0, %s66
    %s81 = sphi 0, %s67
    %s87 = sphi 0, %s89
    %s90 = sphi 0, %s87
    %s91 = sphi 0, %s90
    %s107 = sphi 0, %s91
  $region4: #{tpu_custom_call.1} parent=0 // loop_header_branch
    %12 = sbr.rel (%p10) target = $region8
  $region5: #{tpu_custom_call.1} parent=0 // loop_body
    %s14 = ssub.s32 %s9, 1
    %s15 = ssub.s32 %s9, 2
    %s16 = sadd.s32 %s9, 1
    %s17 = ssub.s32 %s9, %s16
    %p18 = scmp.eq.s32.totalorder %s17, 0
    %s20 = sadd.s32 %s19, 1
    %s21 = scalar_select %p18, %s19, %s20
    %p24 = pneg %p18
    %p25 = scmp.eq.s32.totalorder %s9, 1
    %p26 = por %p24, %p25
    %p27 = scmp.ne.s32.totalorder %s19, %s22
    %p28 = scmp.eq.s32.totalorder %s9, 0
    %p29 = por %p27, %p28
    %p30 = scmp.ne.s32.totalorder %s19, %s22
    %p31 = scmp.eq.s32.totalorder %s14, 1
    %p32 = por %p30, %p31
    %p33 = scmp.ne.s32.totalorder %s22, %s23
    %p34 = scmp.eq.s32.totalorder %s14, 0
    %p35 = por %p33, %p34
    %p36 = scmp.ne.s32.totalorder %s22, %s23
    %p37 = scmp.eq.s32.totalorder %s15, 1
    %p38 = por %p36, %p37
    %p40 = scmp.ne.s32.totalorder %s23, %s39
    %p41 = scmp.eq.s32.totalorder %s15, 0
    %p42 = por %p40, %p41
    %s44 = sadd.s32 %s43, 1
    %p47 = scmp.eq.s32.totalorder %s9, 1
    %p48 = scmp.ne.s32.totalorder %s43, %s45
    %p49 = scmp.eq.s32.totalorder %s9, 0
    %p50 = por %p48, %p49
    %p51 = scmp.ne.s32.totalorder %s43, %s45
    %p52 = scmp.eq.s32.totalorder %s14, 1
    %p53 = por %p51, %p52
    %p54 = scmp.ne.s32.totalorder %s45, %s46
    %p55 = scmp.eq.s32.totalorder %s14, 0
    %p56 = por %p54, %p55
    %p57 = scmp.ne.s32.totalorder %s45, %s46
    %p58 = scmp.eq.s32.totalorder %s15, 1
    %p59 = por %p57, %p58
    %p61 = scmp.ne.s32.totalorder %s46, %s60
    %p62 = scmp.eq.s32.totalorder %s15, 0
    %p63 = por %p61, %p62
    %s65 = sadd.s32 %s64, 1
    %p68 = scmp.eq.s32.totalorder %s9, 1
    %p69 = scmp.ne.s32.totalorder %s64, %s66
    %p70 = scmp.eq.s32.totalorder %s9, 0
    %p71 = por %p69, %p70
    %p72 = scmp.ne.s32.totalorder %s64, %s66
    %p73 = scmp.eq.s32.totalorder %s14, 1
    %p74 = por %p72, %p73
    %p75 = scmp.ne.s32.totalorder %s66, %s67
    %p76 = scmp.eq.s32.totalorder %s14, 0
    %p77 = por %p75, %p76
    %p78 = scmp.ne.s32.totalorder %s66, %s67
    %p79 = scmp.eq.s32.totalorder %s15, 1
    %p80 = por %p78, %p79
    %p82 = scmp.ne.s32.totalorder %s67, %s81
    %p83 = scmp.eq.s32.totalorder %s15, 0
    %p84 = por %p82, %p83
    %s85 = ssub.s32 %s9, %s16
    %p86 = scmp.eq.s32.totalorder %s85, 0
    %s88 = sadd.s32 %s87, 1
    %s89 = scalar_select %p86, %s87, %s88
    %p92 = pneg %p86
    %p93 = scmp.eq.s32.totalorder %s9, 1
    %p94 = por %p92, %p93
    %p95 = scmp.ne.s32.totalorder %s87, %s90
    %p96 = scmp.eq.s32.totalorder %s9, 0
    %p97 = por %p95, %p96
    %p98 = scmp.ne.s32.totalorder %s87, %s90
    %p99 = scmp.eq.s32.totalorder %s14, 1
    %p100 = por %p98, %p99
    %p101 = scmp.ne.s32.totalorder %s90, %s91
    %p102 = scmp.eq.s32.totalorder %s14, 0
    %p103 = por %p101, %p102
    %p104 = scmp.ne.s32.totalorder %s90, %s91
    %p105 = scmp.eq.s32.totalorder %s15, 1
    %p106 = por %p104, %p105
    %p108 = scmp.ne.s32.totalorder %s91, %s107
    %p109 = scmp.eq.s32.totalorder %s15, 0
    %p110 = por %p108, %p109
    %p111 = scmp.le.s32.totalorder 1, %s9
    %p112 = scmp.lt.s32.totalorder %s9, 3
    %p113 = pnand %p111, %p112
    %p114 = pneg %p113
    // Predicated region
    $region9: #{tpu_custom_call.1} parent=5 // pred_check
      _
    $region10: #{tpu_custom_call.1} parent=5 // pred_check_branch
      %116 = sbr.rel (%p113) target = $region12
    $region11: #{tpu_custom_call.1} parent=5 // pred_region
      %s117 = ssub.s32 %s9, 1
      // Predicated region
      $region13: #{tpu_custom_call.1} parent=11 // pred_check
        %p118 = pneg %p56
      $region14: #{tpu_custom_call.1} parent=11 // pred_check_branch
        %120 = sbr.rel (%p118) target = $region16
      $region15: #{tpu_custom_call.1} parent=11 // pred_region
        _
      $region16: #{tpu_custom_call.1} parent=11 // pred_fallthru
        _
      // Predicated region
      $region17: #{tpu_custom_call.1} parent=11 // pred_check
        %p121 = pneg %p77
      $region18: #{tpu_custom_call.1} parent=11 // pred_check_branch
        %123 = sbr.rel (%p121) target = $region20
      $region19: #{tpu_custom_call.1} parent=11 // pred_region
        _
      $region20: #{tpu_custom_call.1} parent=11 // pred_fallthru
        _
    $region12: #{tpu_custom_call.1} parent=5 // pred_fallthru
      _
    %p124 = scmp.lt.s32.totalorder %s9, 2
    // Predicated region
    $region21: #{tpu_custom_call.1} parent=5 // pred_check
      %p125 = pneg %p124
    $region22: #{tpu_custom_call.1} parent=5 // pred_check_branch
      %127 = sbr.rel (%p125) target = $region24
    $region23: #{tpu_custom_call.1} parent=5 // pred_region
      // Predicated region
      $region25: #{tpu_custom_call.1} parent=23 // pred_check
        %p128 = pneg %p29
      $region26: #{tpu_custom_call.1} parent=23 // pred_check_branch
        %130 = sbr.rel (%p128) target = $region28
      $region27: #{tpu_custom_call.1} parent=23 // pred_region
        %p131 = scmp.lt.s32.totalorder %s9, 1
        %s132 = scalar_select %p131, %s9, 1
        %s133 = smul.addr %s132, 51
        %s134 = smul.addr %s133, 4
        %s135 = scalar_lea.vmem %s0, %s134
      $region28: #{tpu_custom_call.1} parent=23 // pred_fallthru
        _
    $region24: #{tpu_custom_call.1} parent=5 // pred_fallthru
      _
    %p136 = scmp.le.s32.totalorder 1, %s9
    %p137 = scmp.lt.s32.totalorder %s9, 3
    %p138 = pnand %p136, %p137
    %p139 = pneg %p138
    // Predicated region
    $region29: #{tpu_custom_call.1} parent=5 // pred_check
      _
    $region30: #{tpu_custom_call.1} parent=5 // pred_check_branch
      %141 = sbr.rel (%p138) target = $region32
    $region31: #{tpu_custom_call.1} parent=5 // pred_region
      %s142 = ssub.s32 %s9, 1
      %p143 = scmp.lt.s32.totalorder %s14, 1
      %s144 = scalar_select %p143, %s14, 1
      %s145 = smul.addr %s144, 51
      %s146 = smul.addr %s145, 4
      %s147 = scalar_lea.vmem %s0, %s146
      %p148 = pneg %p35
      %p149 = pneg %p32
      %p150 = pneg %p56
      %p151 = pneg %p53
      %p152 = pneg %p77
      %p153 = pneg %p74
      %p154 = pneg %p103
      %p155 = pneg %p100
      %p156 = scmp.lt.s32.totalorder %s14, 1
      %s157 = scalar_select %p156, %s14, 1
      %s158 = smul.addr %s157, 32
      %s159 = smul.addr %s158, 8
      %s160 = scalar_lea.vmem %s3, %s159
      %p161 = scmp.lt.s32.totalorder %s14, 1
      %s162 = scalar_select %p161, %s14, 1
      %s163 = smul.addr %s162, 51
      %s164 = smul.addr %s163, 4
      %s165 = scalar_lea.vmem %s0, %s164
      %p166 = scmp.lt.s32.totalorder %s14, 1
      %s167 = scalar_select %p166, %s14, 1
      %s168 = smul.addr %s167, 32
      %s169 = smul.addr %s168, 8
      %s170 = scalar_lea.vmem %s3, %s169
      %v172 = vld [vmem:[%s165] sm:$0xf]
      %v173 = vld [vmem:[%s165 + $0x4] sm:$0xf]
      %v174 = vld [vmem:[%s165 + $0x8] sm:$0x1]
      %v175 = vld [vmem:[%s165 + $0xc] sm:$0xf]
      %v176 = vld [vmem:[%s165 + $0x10] sm:$0xf]
      %v177 = vld [vmem:[%s165 + $0x14] sm:$0x1]
      %v178 = vld [vmem:[%s165 + $0x18] sm:$0xf]
      %v179 = vld [vmem:[%s165 + $0x1c] sm:$0xf]
      %v180 = vld [vmem:[%s165 + $0x20] sm:$0x1]
      %v181 = vld [vmem:[%s165 + $0x24] sm:$0xf]
      %v182 = vld [vmem:[%s165 + $0x28] sm:$0xf]
      %v183 = vld [vmem:[%s165 + $0x2c] sm:$0x1]
      %v184 = vld [vmem:[%s165 + $0x30] sm:$0xf]
      %v185 = vld [vmem:[%s165 + $0x34] sm:$0xf]
      %v186 = vld [vmem:[%s165 + $0x38] sm:$0x1]
      %v187 = vld [vmem:[%s165 + $0x3c] sm:$0xf]
      %v188 = vld [vmem:[%s165 + $0x40] sm:$0xf]
      %v189 = vld [vmem:[%s165 + $0x44] sm:$0x1]
      %v190 = vld [vmem:[%s165 + $0x48] sm:$0xf]
      %v191 = vld [vmem:[%s165 + $0x4c] sm:$0xf]
      %v192 = vld [vmem:[%s165 + $0x50] sm:$0x1]
      %v193 = vld [vmem:[%s165 + $0x54] sm:$0xf]
      %v194 = vld [vmem:[%s165 + $0x58] sm:$0xf]
      %v195 = vld [vmem:[%s165 + $0x5c] sm:$0x1]
      %v196 = vld [vmem:[%s165 + $0x60] sm:$0xf]
      %v197 = vld [vmem:[%s165 + $0x64] sm:$0xf]
      %v198 = vld [vmem:[%s165 + $0x68] sm:$0x1]
      %v199 = vld [vmem:[%s165 + $0x6c] sm:$0xf]
      %v200 = vld [vmem:[%s165 + $0x70] sm:$0xf]
      %v201 = vld [vmem:[%s165 + $0x74] sm:$0x1]
      %v202 = vld [vmem:[%s165 + $0x78] sm:$0xf]
      %v203 = vld [vmem:[%s165 + $0x7c] sm:$0xf]
      %v204 = vld [vmem:[%s165 + $0x80] sm:$0x1]
      %v205 = vld [vmem:[%s165 + $0x84] sm:$0xf]
      %v206 = vld [vmem:[%s165 + $0x88] sm:$0xf]
      %v207 = vld [vmem:[%s165 + $0x8c] sm:$0x1]
      %v208 = vld [vmem:[%s165 + $0x90] sm:$0xf]
      %v209 = vld [vmem:[%s165 + $0x94] sm:$0xf]
      %v210 = vld [vmem:[%s165 + $0x98] sm:$0x1]
      %v211 = vld [vmem:[%s165 + $0x9c] sm:$0xf]
      %v212 = vld [vmem:[%s165 + $0xa0] sm:$0xf]
      %v213 = vld [vmem:[%s165 + $0xa4] sm:$0x1]
      %v214 = vld [vmem:[%s165 + $0xa8] sm:$0xf]
      %v215 = vld [vmem:[%s165 + $0xac] sm:$0xf]
      %v216 = vld [vmem:[%s165 + $0xb0] sm:$0x1]
      %v217 = vld [vmem:[%s165 + $0xb4] sm:$0xf]
      %v218 = vld [vmem:[%s165 + $0xb8] sm:$0xf]
      %v219 = vld [vmem:[%s165 + $0xbc] sm:$0x1]
      %v220 = vld [vmem:[%s165 + $0xc0] sm:$0xf]
      %v221 = vld [vmem:[%s165 + $0xc4] sm:$0xf]
      %v222 = vld [vmem:[%s165 + $0xc8] sm:$0x1]
      %vm223 = vsmask.f32 3328
      %vm224 = vsmask.f32 7440
      %vm225 = vmor %vm223, %vm224
      %v227 = vshrl.u32 %v172, 16
      %v229 = vrot.slane %v227, 4
      %v230 = vshll.u32 %v172, 16
      %v232 = vrot.slane %v230, 5
      %v233 = vor.u32 %v229, %v232
      %v234 = vrot.slane %v233, 4
      %v236 = vshll.u32 %v173, 16
      %v238 = vrot.slane %v236, 5
      %v239 = vsel %vm225, %v234, %v238
      %v240 = vshrl.u32 %v173, 16
      %v242 = vrot.slane %v240, 4
      %v243 = vor.u32 %v242, %v238
      %v244 = vrot.slane %v243, 4
      %v246 = vshll.u32 %v174, 16
      %v248 = vrot.slane %v246, 5
      %v249 = vsel %vm225, %v244, %v248
      %v251 = vshrl.u32 %v175, 16
      %v253 = vrot.slane %v251, 4
      %v254 = vshll.u32 %v175, 16
      %v256 = vrot.slane %v254, 5
      %v257 = vor.u32 %v253, %v256
      %v258 = vrot.slane %v257, 4
      %v260 = vshll.u32 %v176, 16
      %v262 = vrot.slane %v260, 5
      %v263 = vsel %vm225, %v258, %v262
      %v264 = vshrl.u32 %v176, 16
      %v266 = vrot.slane %v264, 4
      %v267 = vor.u32 %v266, %v262
      %v268 = vrot.slane %v267, 4
      %v270 = vshll.u32 %v177, 16
      %v272 = vrot.slane %v270, 5
      %v273 = vsel %vm225, %v268, %v272
      %v275 = vshrl.u32 %v178, 16
      %v277 = vrot.slane %v275, 4
      %v278 = vshll.u32 %v178, 16
      %v280 = vrot.slane %v278, 5
      %v281 = vor.u32 %v277, %v280
      %v282 = vrot.slane %v281, 4
      %v284 = vshll.u32 %v179, 16
      %v286 = vrot.slane %v284, 5
      %v287 = vsel %vm225, %v282, %v286
      %v288 = vshrl.u32 %v179, 16
      %v290 = vrot.slane %v288, 4
      %v291 = vor.u32 %v290, %v286
      %v292 = vrot.slane %v291, 4
      %v294 = vshll.u32 %v180, 16
      %v296 = vrot.slane %v294, 5
      %v297 = vsel %vm225, %v292, %v296
      %v299 = vshrl.u32 %v181, 16
      %v301 = vrot.slane %v299, 4
      %v302 = vshll.u32 %v181, 16
      %v304 = vrot.slane %v302, 5
      %v305 = vor.u32 %v301, %v304
      %v306 = vrot.slane %v305, 4
      %v308 = vshll.u32 %v182, 16
      %v310 = vrot.slane %v308, 5
      %v311 = vsel %vm225, %v306, %v310
      %v312 = vshrl.u32 %v182, 16
      %v314 = vrot.slane %v312, 4
      %v315 = vor.u32 %v314, %v310
      %v316 = vrot.slane %v315, 4
      %v318 = vshll.u32 %v183, 16
      %v320 = vrot.slane %v318, 5
      %v321 = vsel %vm225, %v316, %v320
      %v323 = vshrl.u32 %v184, 16
      %v325 = vrot.slane %v323, 4
      %v326 = vshll.u32 %v184, 16
      %v328 = vrot.slane %v326, 5
      %v329 = vor.u32 %v325, %v328
      %v330 = vrot.slane %v329, 4
      %v332 = vshll.u32 %v185, 16
      %v334 = vrot.slane %v332, 5
      %v335 = vsel %vm225, %v330, %v334
      %v336 = vshrl.u32 %v185, 16
      %v338 = vrot.slane %v336, 4
      %v339 = vor.u32 %v338, %v334
      %v340 = vrot.slane %v339, 4
      %v342 = vshll.u32 %v186, 16
      %v344 = vrot.slane %v342, 5
      %v345 = vsel %vm225, %v340, %v344
      %v347 = vshrl.u32 %v187, 16
      %v349 = vrot.slane %v347, 4
      %v350 = vshll.u32 %v187, 16
      %v352 = vrot.slane %v350, 5
      %v353 = vor.u32 %v349, %v352
      %v354 = vrot.slane %v353, 4
      %v356 = vshll.u32 %v188, 16
      %v358 = vrot.slane %v356, 5
      %v359 = vsel %vm225, %v354, %v358
      %v360 = vshrl.u32 %v188, 16
      %v362 = vrot.slane %v360, 4
      %v363 = vor.u32 %v362, %v358
      %v364 = vrot.slane %v363, 4
      %v366 = vshll.u32 %v189, 16
      %v368 = vrot.slane %v366, 5
      %v369 = vsel %vm225, %v364, %v368
      %v371 = vshrl.u32 %v190, 16
      %v373 = vrot.slane %v371, 4
      %v374 = vshll.u32 %v190, 16
      %v376 = vrot.slane %v374, 5
      %v377 = vor.u32 %v373, %v376
      %v378 = vrot.slane %v377, 4
      %v380 = vshll.u32 %v191, 16
      %v382 = vrot.slane %v380, 5
      %v383 = vsel %vm225, %v378, %v382
      %v384 = vshrl.u32 %v191, 16
      %v386 = vrot.slane %v384, 4
      %v387 = vor.u32 %v386, %v382
      %v388 = vrot.slane %v387, 4
      %v390 = vshll.u32 %v192, 16
      %v392 = vrot.slane %v390, 5
      %v393 = vsel %vm225, %v388, %v392
      %v395 = vshrl.u32 %v193, 16
      %v397 = vrot.slane %v395, 4
      %v398 = vshll.u32 %v193, 16
      %v400 = vrot.slane %v398, 5
      %v401 = vor.u32 %v397, %v400
      %v402 = vrot.slane %v401, 4
      %v404 = vshll.u32 %v194, 16
      %v406 = vrot.slane %v404, 5
      %v407 = vsel %vm225, %v402, %v406
      %v408 = vshrl.u32 %v194, 16
      %v410 = vrot.slane %v408, 4
      %v411 = vor.u32 %v410, %v406
      %v412 = vrot.slane %v411, 4
      %v414 = vshll.u32 %v195, 16
      %v416 = vrot.slane %v414, 5
      %v417 = vsel %vm225, %v412, %v416
      %v419 = vshrl.u32 %v196, 16
      %v421 = vrot.slane %v419, 4
      %v422 = vshll.u32 %v196, 16
      %v424 = vrot.slane %v422, 5
      %v425 = vor.u32 %v421, %v424
      %v426 = vrot.slane %v425, 4
      %v428 = vshll.u32 %v197, 16
      %v430 = vrot.slane %v428, 5
      %v431 = vsel %vm225, %v426, %v430
      %v432 = vshrl.u32 %v197, 16
      %v434 = vrot.slane %v432, 4
      %v435 = vor.u32 %v434, %v430
      %v436 = vrot.slane %v435, 4
      %v438 = vshll.u32 %v198, 16
      %v440 = vrot.slane %v438, 5
      %v441 = vsel %vm225, %v436, %v440
      %v443 = vshrl.u32 %v199, 16
      %v445 = vrot.slane %v443, 4
      %v446 = vshll.u32 %v199, 16
      %v448 = vrot.slane %v446, 5
      %v449 = vor.u32 %v445, %v448
      %v450 = vrot.slane %v449, 4
      %v452 = vshll.u32 %v200, 16
      %v454 = vrot.slane %v452, 5
      %v455 = vsel %vm225, %v450, %v454
      %v456 = vshrl.u32 %v200, 16
      %v458 = vrot.slane %v456, 4
      %v459 = vor.u32 %v458, %v454
      %v460 = vrot.slane %v459, 4
      %v462 = vshll.u32 %v201, 16
      %v464 = vrot.slane %v462, 5
      %v465 = vsel %vm225, %v460, %v464
      %v467 = vshrl.u32 %v202, 16
      %v469 = vrot.slane %v467, 4
      %v470 = vshll.u32 %v202, 16
      %v472 = vrot.slane %v470, 5
      %v473 = vor.u32 %v469, %v472
      %v474 = vrot.slane %v473, 4
      %v476 = vshll.u32 %v203, 16
      %v478 = vrot.slane %v476, 5
      %v479 = vsel %vm225, %v474, %v478
      %v480 = vshrl.u32 %v203, 16
      %v482 = vrot.slane %v480, 4
      %v483 = vor.u32 %v482, %v478
      %v484 = vrot.slane %v483, 4
      %v486 = vshll.u32 %v204, 16
      %v488 = vrot.slane %v486, 5
      %v489 = vsel %vm225, %v484, %v488
      %v491 = vshrl.u32 %v205, 16
      %v493 = vrot.slane %v491, 4
      %v494 = vshll.u32 %v205, 16
      %v496 = vrot.slane %v494, 5
      %v497 = vor.u32 %v493, %v496
      %v498 = vrot.slane %v497, 4
      %v500 = vshll.u32 %v206, 16
      %v502 = vrot.slane %v500, 5
      %v503 = vsel %vm225, %v498, %v502
      %v504 = vshrl.u32 %v206, 16
      %v506 = vrot.slane %v504, 4
      %v507 = vor.u32 %v506, %v502
      %v508 = vrot.slane %v507, 4
      %v510 = vshll.u32 %v207, 16
      %v512 = vrot.slane %v510, 5
      %v513 = vsel %vm225, %v508, %v512
      %v515 = vshrl.u32 %v208, 16
      %v517 = vrot.slane %v515, 4
      %v518 = vshll.u32 %v208, 16
      %v520 = vrot.slane %v518, 5
      %v521 = vor.u32 %v517, %v520
      %v522 = vrot.slane %v521, 4
      %v524 = vshll.u32 %v209, 16
      %v526 = vrot.slane %v524, 5
      %v527 = vsel %vm225, %v522, %v526
      %v528 = vshrl.u32 %v209, 16
      %v530 = vrot.slane %v528, 4
      %v531 = vor.u32 %v530, %v526
      %v532 = vrot.slane %v531, 4
      %v534 = vshll.u32 %v210, 16
      %v536 = vrot.slane %v534, 5
      %v537 = vsel %vm225, %v532, %v536
      %v539 = vshrl.u32 %v211, 16
      %v541 = vrot.slane %v539, 4
      %v542 = vshll.u32 %v211, 16
      %v544 = vrot.slane %v542, 5
      %v545 = vor.u32 %v541, %v544
      %v546 = vrot.slane %v545, 4
      %v548 = vshll.u32 %v212, 16
      %v550 = vrot.slane %v548, 5
      %v551 = vsel %vm225, %v546, %v550
      %v552 = vshrl.u32 %v212, 16
      %v554 = vrot.slane %v552, 4
      %v555 = vor.u32 %v554, %v550
      %v556 = vrot.slane %v555, 4
      %v558 = vshll.u32 %v213, 16
      %v560 = vrot.slane %v558, 5
      %v561 = vsel %vm225, %v556, %v560
      %v563 = vshrl.u32 %v214, 16
      %v565 = vrot.slane %v563, 4
      %v566 = vshll.u32 %v214, 16
      %v568 = vrot.slane %v566, 5
      %v569 = vor.u32 %v565, %v568
      %v570 = vrot.slane %v569, 4
      %v572 = vshll.u32 %v215, 16
      %v574 = vrot.slane %v572, 5
      %v575 = vsel %vm225, %v570, %v574
      %v576 = vshrl.u32 %v215, 16
      %v578 = vrot.slane %v576, 4
      %v579 = vor.u32 %v578, %v574
      %v580 = vrot.slane %v579, 4
      %v582 = vshll.u32 %v216, 16
      %v584 = vrot.slane %v582, 5
      %v585 = vsel %vm225, %v580, %v584
      %v587 = vshrl.u32 %v217, 16
      %v589 = vrot.slane %v587, 4
      %v590 = vshll.u32 %v217, 16
      %v592 = vrot.slane %v590, 5
      %v593 = vor.u32 %v589, %v592
      %v594 = vrot.slane %v593, 4
      %v596 = vshll.u32 %v218, 16
      %v598 = vrot.slane %v596, 5
      %v599 = vsel %vm225, %v594, %v598
      %v600 = vshrl.u32 %v218, 16
      %v602 = vrot.slane %v600, 4
      %v603 = vor.u32 %v602, %v598
      %v604 = vrot.slane %v603, 4
      %v606 = vshll.u32 %v219, 16
      %v608 = vrot.slane %v606, 5
      %v609 = vsel %vm225, %v604, %v608
      %v611 = vshrl.u32 %v220, 16
      %v613 = vrot.slane %v611, 4
      %v614 = vshll.u32 %v220, 16
      %v616 = vrot.slane %v614, 5
      %v617 = vor.u32 %v613, %v616
      %v618 = vrot.slane %v617, 4
      %v620 = vshll.u32 %v221, 16
      %v622 = vrot.slane %v620, 5
      %v623 = vsel %vm225, %v618, %v622
      %v624 = vshrl.u32 %v221, 16
      %v626 = vrot.slane %v624, 4
      %v627 = vor.u32 %v626, %v622
      %v628 = vrot.slane %v627, 4
      %v630 = vshll.u32 %v222, 16
      %v632 = vrot.slane %v630, 5
      %v633 = vsel %vm225, %v628, %v632
      %v634 = vld [vmem:[%s1] sm:$0x3]
      %s635 = scalar_lea.vmem %s1, 2
      %v636 = vld [vmem:[%s635] sm:$0x3]
      %v637 = vunpack.c.l.b16 %v239
      %v638 = vunpack.c.l.b16 %v249
      %v639 = vunpack.c.l.b16 %v263
      %v640 = vunpack.c.l.b16 %v273
      %v641 = vunpack.c.l.b16 %v287
      %v642 = vunpack.c.l.b16 %v297
      %v643 = vunpack.c.l.b16 %v311
      %v644 = vunpack.c.l.b16 %v321
      %v645 = vunpack.c.l.b16 %v335
      %v646 = vunpack.c.l.b16 %v345
      %v647 = vunpack.c.l.b16 %v359
      %v648 = vunpack.c.l.b16 %v369
      %v649 = vunpack.c.l.b16 %v383
      %v650 = vunpack.c.l.b16 %v393
      %v651 = vunpack.c.l.b16 %v407
      %v652 = vunpack.c.l.b16 %v417
      %v653 = vunpack.c.l.b16 %v431
      %v654 = vunpack.c.l.b16 %v441
      %v655 = vunpack.c.l.b16 %v455
      %v656 = vunpack.c.l.b16 %v465
      %v657 = vunpack.c.l.b16 %v479
      %v658 = vunpack.c.l.b16 %v489
      %v659 = vunpack.c.l.b16 %v503
      %v660 = vunpack.c.l.b16 %v513
      %v661 = vunpack.c.l.b16 %v527
      %v662 = vunpack.c.l.b16 %v537
      %v663 = vunpack.c.l.b16 %v551
      %v664 = vunpack.c.l.b16 %v561
      %v665 = vunpack.c.l.b16 %v575
      %v666 = vunpack.c.l.b16 %v585
      %v667 = vunpack.c.l.b16 %v599
      %v668 = vunpack.c.l.b16 %v609
      %v669 = vpack.c.b16 %v638, %v637
      %v670 = vpack.c.b16 %v640, %v639
      %v671 = vpack.c.b16 %v642, %v641
      %v672 = vpack.c.b16 %v644, %v643
      %v673 = vpack.c.b16 %v646, %v645
      %v674 = vpack.c.b16 %v648, %v647
      %v675 = vpack.c.b16 %v650, %v649
      %v676 = vpack.c.b16 %v652, %v651
      %v677 = vpack.c.b16 %v654, %v653
      %v678 = vpack.c.b16 %v656, %v655
      %v679 = vpack.c.b16 %v658, %v657
      %v680 = vpack.c.b16 %v660, %v659
      %v681 = vpack.c.b16 %v662, %v661
      %v682 = vpack.c.b16 %v664, %v663
      %v683 = vpack.c.b16 %v666, %v665
      %v684 = vpack.c.b16 %v668, %v667
      %vm685 = vcmask 31744
      %v687 = vsel %vm685, %v669, 0
      %v690 = vsel %vm685, %v670, 0
      %v693 = vsel %vm685, %v671, 0
      %v696 = vsel %vm685, %v672, 0
      %v699 = vsel %vm685, %v673, 0
      %v702 = vsel %vm685, %v674, 0
      %v705 = vsel %vm685, %v675, 0
      %v708 = vsel %vm685, %v676, 0
      %v711 = vsel %vm685, %v677, 0
      %v714 = vsel %vm685, %v678, 0
      %v717 = vsel %vm685, %v679, 0
      %v720 = vsel %vm685, %v680, 0
      %v723 = vsel %vm685, %v681, 0
      %v726 = vsel %vm685, %v682, 0
      %v729 = vsel %vm685, %v683, 0
      %v732 = vsel %vm685, %v684, 0
      %vm734 = vcmask 1041408
      %v736 = vsel %vm734, %v636, 0
      %738 = vmatprep.subr.bf16.mxu0 0
      %739 = vmatpush1.bf16.msra.mxu0 0
      %740 = vmatprep.subr.bf16.mxu0 0
      %741 = vmatpush1.bf16.msra.mxu0 0
      %742 = vmatprep.subr.bf16.mxu0 0
      %743 = vmatpush1.bf16.msra.mxu0 0
      %744 = vmatprep.subr.bf16.mxu0 0
      %745 = vmatpush1.bf16.msra.mxu0 0
      %746 = vmatprep.subr.bf16.mxu0 0
      %747 = vmatpush1.bf16.msra.mxu0 0
      %748 = vmatprep.subr.bf16.mxu0 0
      %749 = vmatpush1.bf16.msra.mxu0 0
      %750 = vmatprep.subr.bf16.mxu0 0
      %751 = vmatpush1.bf16.msra.mxu0 0
      %752 = vmatprep.subr.bf16.mxu0 0
      %753 = vmatpush1.bf16.msra.mxu0 %v736
      %754 = vmatprep.subr.bf16.mxu0 0
      %755 = vmatpush2.bf16.msra.mxu0 0
      %756 = vmatprep.subr.bf16.mxu0 0
      %757 = vmatpush2.bf16.msra.mxu0 0
      %758 = vmatprep.subr.bf16.mxu0 0
      %759 = vmatpush2.bf16.msra.mxu0 0
      %760 = vmatprep.subr.bf16.mxu0 0
      %761 = vmatpush2.bf16.msra.mxu0 0
      %762 = vmatprep.subr.bf16.mxu0 0
      %763 = vmatpush2.bf16.msra.mxu0 0
      %764 = vmatprep.subr.bf16.mxu0 0
      %765 = vmatpush2.bf16.msra.mxu0 0
      %766 = vmatprep.subr.bf16.mxu0 0
      %767 = vmatpush2.bf16.msra.mxu0 0
      %768 = vmatprep.subr.bf16.mxu0 0
      %769 = vmatpush2.bf16.msra.mxu0 0
      %770 = vmatprep.mubr.bf16.mxu0 0
      %771 = vmatmul.mubr.bf16.gmra.mxu0 %v687
      %v772 = vpop.f32.mrf.mxu0
      %v773 = vadd.f32 0.0, %v772
      %v774 = vpop.f32.mrf.mxu0
      %v775 = vpop.f32.mrf.mxu0
      %v776 = vadd.f32 0.0, %v775
      %v777 = vpop.f32.mrf.mxu0
      %778 = vmatprep.mubr.bf16.mxu0 0
      %779 = vmatmul.mubr.bf16.gmra.mxu0 %v690
      %v780 = vpop.f32.mrf.mxu0
      %v781 = vadd.f32 0.0, %v780
      %v782 = vpop.f32.mrf.mxu0
      %v783 = vpop.f32.mrf.mxu0
      %v784 = vadd.f32 0.0, %v783
      %v785 = vpop.f32.mrf.mxu0
      %786 = vmatprep.mubr.bf16.mxu0 0
      %787 = vmatmul.mubr.bf16.gmra.mxu0 %v693
      %v788 = vpop.f32.mrf.mxu0
      %v789 = vadd.f32 0.0, %v788
      %v790 = vpop.f32.mrf.mxu0
      %v791 = vpop.f32.mrf.mxu0
      %v792 = vadd.f32 0.0, %v791
      %v793 = vpop.f32.mrf.mxu0
      %794 = vmatprep.mubr.bf16.mxu0 0
      %795 = vmatmul.mubr.bf16.gmra.mxu0 %v696
      %v796 = vpop.f32.mrf.mxu0
      %v797 = vadd.f32 0.0, %v796
      %v798 = vpop.f32.mrf.mxu0
      %v799 = vpop.f32.mrf.mxu0
      %v800 = vadd.f32 0.0, %v799
      %v801 = vpop.f32.mrf.mxu0
      %802 = vmatprep.mubr.bf16.mxu0 0
      %803 = vmatmul.mubr.bf16.gmra.mxu0 %v699
      %v804 = vpop.f32.mrf.mxu0
      %v805 = vadd.f32 0.0, %v804
      %v806 = vpop.f32.mrf.mxu0
      %v807 = vpop.f32.mrf.mxu0
      %v808 = vadd.f32 0.0, %v807
      %v809 = vpop.f32.mrf.mxu0
      %810 = vmatprep.mubr.bf16.mxu0 0
      %811 = vmatmul.mubr.bf16.gmra.mxu0 %v702
      %v812 = vpop.f32.mrf.mxu0
      %v813 = vadd.f32 0.0, %v812
      %v814 = vpop.f32.mrf.mxu0
      %v815 = vpop.f32.mrf.mxu0
      %v816 = vadd.f32 0.0, %v815
      %v817 = vpop.f32.mrf.mxu0
      %818 = vmatprep.mubr.bf16.mxu0 0
      %819 = vmatmul.mubr.bf16.gmra.mxu0 %v705
      %v820 = vpop.f32.mrf.mxu0
      %v821 = vadd.f32 0.0, %v820
      %v822 = vpop.f32.mrf.mxu0
      %v823 = vpop.f32.mrf.mxu0
      %v824 = vadd.f32 0.0, %v823
      %v825 = vpop.f32.mrf.mxu0
      %826 = vmatprep.mubr.bf16.mxu0 0
      %827 = vmatmul.mubr.bf16.gmra.mxu0 %v708
      %v828 = vpop.f32.mrf.mxu0
      %v829 = vadd.f32 0.0, %v828
      %v830 = vpop.f32.mrf.mxu0
      %v831 = vpop.f32.mrf.mxu0
      %v832 = vadd.f32 0.0, %v831
      %v833 = vpop.f32.mrf.mxu0
      %834 = vmatprep.mubr.bf16.mxu0 0
      %835 = vmatmul.mubr.bf16.gmra.mxu0 %v711
      %v836 = vpop.f32.mrf.mxu0
      %v837 = vadd.f32 0.0, %v836
      %v838 = vpop.f32.mrf.mxu0
      %v839 = vpop.f32.mrf.mxu0
      %v840 = vadd.f32 0.0, %v839
      %v841 = vpop.f32.mrf.mxu0
      %842 = vmatprep.mubr.bf16.mxu0 0
      %843 = vmatmul.mubr.bf16.gmra.mxu0 %v714
      %v844 = vpop.f32.mrf.mxu0
      %v845 = vadd.f32 0.0, %v844
      %v846 = vpop.f32.mrf.mxu0
      %v847 = vpop.f32.mrf.mxu0
      %v848 = vadd.f32 0.0, %v847
      %v849 = vpop.f32.mrf.mxu0
      %850 = vmatprep.mubr.bf16.mxu0 0
      %851 = vmatmul.mubr.bf16.gmra.mxu0 %v717
      %v852 = vpop.f32.mrf.mxu0
      %v853 = vadd.f32 0.0, %v852
      %v854 = vpop.f32.mrf.mxu0
      %v855 = vpop.f32.mrf.mxu0
      %v856 = vadd.f32 0.0, %v855
      %v857 = vpop.f32.mrf.mxu0
      %858 = vmatprep.mubr.bf16.mxu0 0
      %859 = vmatmul.mubr.bf16.gmra.mxu0 %v720
      %v860 = vpop.f32.mrf.mxu0
      %v861 = vadd.f32 0.0, %v860
      %v862 = vpop.f32.mrf.mxu0
      %v863 = vpop.f32.mrf.mxu0
      %v864 = vadd.f32 0.0, %v863
      %v865 = vpop.f32.mrf.mxu0
      %866 = vmatprep.mubr.bf16.mxu0 0
      %867 = vmatmul.mubr.bf16.gmra.mxu0 %v723
      %v868 = vpop.f32.mrf.mxu0
      %v869 = vadd.f32 0.0, %v868
      %v870 = vpop.f32.mrf.mxu0
      %v871 = vpop.f32.mrf.mxu0
      %v872 = vadd.f32 0.0, %v871
      %v873 = vpop.f32.mrf.mxu0
      %874 = vmatprep.mubr.bf16.mxu0 0
      %875 = vmatmul.mubr.bf16.gmra.mxu0 %v726
      %v876 = vpop.f32.mrf.mxu0
      %v877 = vadd.f32 0.0, %v876
      %v878 = vpop.f32.mrf.mxu0
      %v879 = vpop.f32.mrf.mxu0
      %v880 = vadd.f32 0.0, %v879
      %v881 = vpop.f32.mrf.mxu0
      %882 = vmatprep.mubr.bf16.mxu0 0
      %883 = vmatmul.mubr.bf16.gmra.mxu0 %v729
      %v884 = vpop.f32.mrf.mxu0
      %v885 = vadd.f32 0.0, %v884
      %v886 = vpop.f32.mrf.mxu0
      %v887 = vpop.f32.mrf.mxu0
      %v888 = vadd.f32 0.0, %v887
      %v889 = vpop.f32.mrf.mxu0
      %890 = vmatprep.mubr.bf16.mxu0 0
      %891 = vmatmul.mubr.bf16.gmra.mxu0 %v732
      %v892 = vpop.f32.mrf.mxu0
      %v893 = vadd.f32 0.0, %v892
      %v894 = vpop.f32.mrf.mxu0
      %v895 = vpop.f32.mrf.mxu0
      %v896 = vadd.f32 0.0, %v895
      %v897 = vpop.f32.mrf.mxu0
      %898 = vdwg.mxu0
      %v931 = vunpack.c.l.b16 %v172
      %v932 = vunpack.c.l.b16 %v173
      %v933 = vunpack.c.l.b16 %v175
      %v934 = vunpack.c.l.b16 %v176
      %v935 = vunpack.c.l.b16 %v178
      %v936 = vunpack.c.l.b16 %v179
      %v937 = vunpack.c.l.b16 %v181
      %v938 = vunpack.c.l.b16 %v182
      %v939 = vunpack.c.l.b16 %v184
      %v940 = vunpack.c.l.b16 %v185
      %v941 = vunpack.c.l.b16 %v187
      %v942 = vunpack.c.l.b16 %v188
      %v943 = vunpack.c.l.b16 %v190
      %v944 = vunpack.c.l.b16 %v191
      %v945 = vunpack.c.l.b16 %v193
      %v946 = vunpack.c.l.b16 %v194
      %v947 = vunpack.c.l.b16 %v196
      %v948 = vunpack.c.l.b16 %v197
      %v949 = vunpack.c.l.b16 %v199
      %v950 = vunpack.c.l.b16 %v200
      %v951 = vunpack.c.l.b16 %v202
      %v952 = vunpack.c.l.b16 %v203
      %v953 = vunpack.c.l.b16 %v205
      %v954 = vunpack.c.l.b16 %v206
      %v955 = vunpack.c.l.b16 %v208
      %v956 = vunpack.c.l.b16 %v209
      %v957 = vunpack.c.l.b16 %v211
      %v958 = vunpack.c.l.b16 %v212
      %v959 = vunpack.c.l.b16 %v214
      %v960 = vunpack.c.l.b16 %v215
      %v961 = vunpack.c.l.b16 %v217
      %v962 = vunpack.c.l.b16 %v218
      %v963 = vpack.c.b16 %v932, %v931
      %v964 = vpack.c.b16 %v934, %v933
      %v965 = vpack.c.b16 %v936, %v935
      %v966 = vpack.c.b16 %v938, %v937
      %v967 = vpack.c.b16 %v940, %v939
      %v968 = vpack.c.b16 %v942, %v941
      %v969 = vpack.c.b16 %v944, %v943
      %v970 = vpack.c.b16 %v946, %v945
      %v971 = vpack.c.b16 %v948, %v947
      %v972 = vpack.c.b16 %v950, %v949
      %v973 = vpack.c.b16 %v952, %v951
      %v974 = vpack.c.b16 %v954, %v953
      %v975 = vpack.c.b16 %v956, %v955
      %v976 = vpack.c.b16 %v958, %v957
      %v977 = vpack.c.b16 %v960, %v959
      %v978 = vpack.c.b16 %v962, %v961
      %v980 = vsel %vm685, %v963, 0
      %v983 = vsel %vm685, %v964, 0
      %v986 = vsel %vm685, %v965, 0
      %v989 = vsel %vm685, %v966, 0
      %v992 = vsel %vm685, %v967, 0
      %v995 = vsel %vm685, %v968, 0
      %v998 = vsel %vm685, %v969, 0
      %v1001 = vsel %vm685, %v970, 0
      %v1004 = vsel %vm685, %v971, 0
      %v1007 = vsel %vm685, %v972, 0
      %v1010 = vsel %vm685, %v973, 0
      %v1013 = vsel %vm685, %v974, 0
      %v1016 = vsel %vm685, %v975, 0
      %v1019 = vsel %vm685, %v976, 0
      %v1022 = vsel %vm685, %v977, 0
      %v1025 = vsel %vm685, %v978, 0
      %v1028 = vsel %vm734, %v634, 0
      %1030 = vmatprep.subr.bf16.mxu0 0
      %1031 = vmatpush1.bf16.msra.mxu0 0
      %1032 = vmatprep.subr.bf16.mxu0 0
      %1033 = vmatpush1.bf16.msra.mxu0 0
      %1034 = vmatprep.subr.bf16.mxu0 0
      %1035 = vmatpush1.bf16.msra.mxu0 0
      %1036 = vmatprep.subr.bf16.mxu0 0
      %1037 = vmatpush1.bf16.msra.mxu0 0
      %1038 = vmatprep.subr.bf16.mxu0 0
      %1039 = vmatpush1.bf16.msra.mxu0 0
      %1040 = vmatprep.subr.bf16.mxu0 0
      %1041 = vmatpush1.bf16.msra.mxu0 0
      %1042 = vmatprep.subr.bf16.mxu0 0
      %1043 = vmatpush1.bf16.msra.mxu0 0
      %1044 = vmatprep.subr.bf16.mxu0 0
      %1045 = vmatpush1.bf16.msra.mxu0 %v1028
      %1046 = vmatprep.subr.bf16.mxu0 0
      %1047 = vmatpush2.bf16.msra.mxu0 0
      %1048 = vmatprep.subr.bf16.mxu0 0
      %1049 = vmatpush2.bf16.msra.mxu0 0
      %1050 = vmatprep.subr.bf16.mxu0 0
      %1051 = vmatpush2.bf16.msra.mxu0 0
      %1052 = vmatprep.subr.bf16.mxu0 0
      %1053 = vmatpush2.bf16.msra.mxu0 0
      %1054 = vmatprep.subr.bf16.mxu0 0
      %1055 = vmatpush2.bf16.msra.mxu0 0
      %1056 = vmatprep.subr.bf16.mxu0 0
      %1057 = vmatpush2.bf16.msra.mxu0 0
      %1058 = vmatprep.subr.bf16.mxu0 0
      %1059 = vmatpush2.bf16.msra.mxu0 0
      %1060 = vmatprep.subr.bf16.mxu0 0
      %1061 = vmatpush2.bf16.msra.mxu0 0
      %1062 = vmatprep.mubr.bf16.mxu0 0
      %1063 = vmatmul.mubr.bf16.gmra.mxu0 %v980
      %v1064 = vpop.f32.mrf.mxu0
      %v1065 = vadd.f32 %v773, %v1064
      %v1066 = vpop.f32.mrf.mxu0
      %v1067 = vpop.f32.mrf.mxu0
      %v1068 = vadd.f32 %v776, %v1067
      %v1069 = vpop.f32.mrf.mxu0
      %1070 = vmatprep.mubr.bf16.mxu0 0
      %1071 = vmatmul.mubr.bf16.gmra.mxu0 %v983
      %v1072 = vpop.f32.mrf.mxu0
      %v1073 = vadd.f32 %v781, %v1072
      %v1074 = vpop.f32.mrf.mxu0
      %v1075 = vpop.f32.mrf.mxu0
      %v1076 = vadd.f32 %v784, %v1075
      %v1077 = vpop.f32.mrf.mxu0
      %1078 = vmatprep.mubr.bf16.mxu0 0
      %1079 = vmatmul.mubr.bf16.gmra.mxu0 %v986
      %v1080 = vpop.f32.mrf.mxu0
      %v1081 = vadd.f32 %v789, %v1080
      %v1082 = vpop.f32.mrf.mxu0
      %v1083 = vpop.f32.mrf.mxu0
      %v1084 = vadd.f32 %v792, %v1083
      %v1085 = vpop.f32.mrf.mxu0
      %1086 = vmatprep.mubr.bf16.mxu0 0
      %1087 = vmatmul.mubr.bf16.gmra.mxu0 %v989
      %v1088 = vpop.f32.mrf.mxu0
      %v1089 = vadd.f32 %v797, %v1088
      %v1090 = vpop.f32.mrf.mxu0
      %v1091 = vpop.f32.mrf.mxu0
      %v1092 = vadd.f32 %v800, %v1091
      %v1093 = vpop.f32.mrf.mxu0
      %1094 = vmatprep.mubr.bf16.mxu0 0
      %1095 = vmatmul.mubr.bf16.gmra.mxu0 %v992
      %v1096 = vpop.f32.mrf.mxu0
      %v1097 = vadd.f32 %v805, %v1096
      %v1098 = vpop.f32.mrf.mxu0
      %v1099 = vpop.f32.mrf.mxu0
      %v1100 = vadd.f32 %v808, %v1099
      %v1101 = vpop.f32.mrf.mxu0
      %1102 = vmatprep.mubr.bf16.mxu0 0
      %1103 = vmatmul.mubr.bf16.gmra.mxu0 %v995
      %v1104 = vpop.f32.mrf.mxu0
      %v1105 = vadd.f32 %v813, %v1104
      %v1106 = vpop.f32.mrf.mxu0
      %v1107 = vpop.f32.mrf.mxu0
      %v1108 = vadd.f32 %v816, %v1107
      %v1109 = vpop.f32.mrf.mxu0
      %1110 = vmatprep.mubr.bf16.mxu0 0
      %1111 = vmatmul.mubr.bf16.gmra.mxu0 %v998
      %v1112 = vpop.f32.mrf.mxu0
      %v1113 = vadd.f32 %v821, %v1112
      %v1114 = vpop.f32.mrf.mxu0
      %v1115 = vpop.f32.mrf.mxu0
      %v1116 = vadd.f32 %v824, %v1115
      %v1117 = vpop.f32.mrf.mxu0
      %1118 = vmatprep.mubr.bf16.mxu0 0
      %1119 = vmatmul.mubr.bf16.gmra.mxu0 %v1001
      %v1120 = vpop.f32.mrf.mxu0
      %v1121 = vadd.f32 %v829, %v1120
      %v1122 = vpop.f32.mrf.mxu0
      %v1123 = vpop.f32.mrf.mxu0
      %v1124 = vadd.f32 %v832, %v1123
      %v1125 = vpop.f32.mrf.mxu0
      %1126 = vmatprep.mubr.bf16.mxu0 0
      %1127 = vmatmul.mubr.bf16.gmra.mxu0 %v1004
      %v1128 = vpop.f32.mrf.mxu0
      %v1129 = vadd.f32 %v837, %v1128
      %v1130 = vpop.f32.mrf.mxu0
      %v1131 = vpop.f32.mrf.mxu0
      %v1132 = vadd.f32 %v840, %v1131
      %v1133 = vpop.f32.mrf.mxu0
      %1134 = vmatprep.mubr.bf16.mxu0 0
      %1135 = vmatmul.mubr.bf16.gmra.mxu0 %v1007
      %v1136 = vpop.f32.mrf.mxu0
      %v1137 = vadd.f32 %v845, %v1136
      %v1138 = vpop.f32.mrf.mxu0
      %v1139 = vpop.f32.mrf.mxu0
      %v1140 = vadd.f32 %v848, %v1139
      %v1141 = vpop.f32.mrf.mxu0
      %1142 = vmatprep.mubr.bf16.mxu0 0
      %1143 = vmatmul.mubr.bf16.gmra.mxu0 %v1010
      %v1144 = vpop.f32.mrf.mxu0
      %v1145 = vadd.f32 %v853, %v1144
      %v1146 = vpop.f32.mrf.mxu0
      %v1147 = vpop.f32.mrf.mxu0
      %v1148 = vadd.f32 %v856, %v1147
      %v1149 = vpop.f32.mrf.mxu0
      %1150 = vmatprep.mubr.bf16.mxu0 0
      %1151 = vmatmul.mubr.bf16.gmra.mxu0 %v1013
      %v1152 = vpop.f32.mrf.mxu0
      %v1153 = vadd.f32 %v861, %v1152
      %v1154 = vpop.f32.mrf.mxu0
      %v1155 = vpop.f32.mrf.mxu0
      %v1156 = vadd.f32 %v864, %v1155
      %v1157 = vpop.f32.mrf.mxu0
      %1158 = vmatprep.mubr.bf16.mxu0 0
      %1159 = vmatmul.mubr.bf16.gmra.mxu0 %v1016
      %v1160 = vpop.f32.mrf.mxu0
      %v1161 = vadd.f32 %v869, %v1160
      %v1162 = vpop.f32.mrf.mxu0
      %v1163 = vpop.f32.mrf.mxu0
      %v1164 = vadd.f32 %v872, %v1163
      %v1165 = vpop.f32.mrf.mxu0
      %1166 = vmatprep.mubr.bf16.mxu0 0
      %1167 = vmatmul.mubr.bf16.gmra.mxu0 %v1019
      %v1168 = vpop.f32.mrf.mxu0
      %v1169 = vadd.f32 %v877, %v1168
      %v1170 = vpop.f32.mrf.mxu0
      %v1171 = vpop.f32.mrf.mxu0
      %v1172 = vadd.f32 %v880, %v1171
      %v1173 = vpop.f32.mrf.mxu0
      %1174 = vmatprep.mubr.bf16.mxu0 0
      %1175 = vmatmul.mubr.bf16.gmra.mxu0 %v1022
      %v1176 = vpop.f32.mrf.mxu0
      %v1177 = vadd.f32 %v885, %v1176
      %v1178 = vpop.f32.mrf.mxu0
      %v1179 = vpop.f32.mrf.mxu0
      %v1180 = vadd.f32 %v888, %v1179
      %v1181 = vpop.f32.mrf.mxu0
      %1182 = vmatprep.mubr.bf16.mxu0 0
      %1183 = vmatmul.mubr.bf16.gmra.mxu0 %v1025
      %v1184 = vpop.f32.mrf.mxu0
      %v1185 = vadd.f32 %v893, %v1184
      %v1186 = vpop.f32.mrf.mxu0
      %v1187 = vpop.f32.mrf.mxu0
      %v1188 = vadd.f32 %v896, %v1187
      %v1189 = vpop.f32.mrf.mxu0
      %1190 = vdwg.mxu0
      %s1191 = scalar_lea.vmem %s1, 4
      %v1192 = vld [vmem:[%s1191] sm:$0x3]
      %v1195 = vunpack.c.l.b16 %v220
      %v1196 = vunpack.c.l.b16 %v221
      %v1197 = vpack.c.b16 %v1196, %v1195
      %v1199 = vsel %vm685, %v1197, 0
      %v1202 = vsel %vm734, %v1192, 0
      %1204 = vmatprep.subr.bf16.mxu0 0
      %1205 = vmatpush1.bf16.msra.mxu0 0
      %1206 = vmatprep.subr.bf16.mxu0 0
      %1207 = vmatpush1.bf16.msra.mxu0 0
      %1208 = vmatprep.subr.bf16.mxu0 0
      %1209 = vmatpush1.bf16.msra.mxu0 0
      %1210 = vmatprep.subr.bf16.mxu0 0
      %1211 = vmatpush1.bf16.msra.mxu0 0
      %1212 = vmatprep.subr.bf16.mxu0 0
      %1213 = vmatpush1.bf16.msra.mxu0 0
      %1214 = vmatprep.subr.bf16.mxu0 0
      %1215 = vmatpush1.bf16.msra.mxu0 0
      %1216 = vmatprep.subr.bf16.mxu0 0
      %1217 = vmatpush1.bf16.msra.mxu0 0
      %1218 = vmatprep.subr.bf16.mxu0 0
      %1219 = vmatpush1.bf16.msra.mxu0 %v1202
      %1220 = vmatprep.subr.bf16.mxu0 0
      %1221 = vmatpush2.bf16.msra.mxu0 0
      %1222 = vmatprep.subr.bf16.mxu0 0
      %1223 = vmatpush2.bf16.msra.mxu0 0
      %1224 = vmatprep.subr.bf16.mxu0 0
      %1225 = vmatpush2.bf16.msra.mxu0 0
      %1226 = vmatprep.subr.bf16.mxu0 0
      %1227 = vmatpush2.bf16.msra.mxu0 0
      %1228 = vmatprep.subr.bf16.mxu0 0
      %1229 = vmatpush2.bf16.msra.mxu0 0
      %1230 = vmatprep.subr.bf16.mxu0 0
      %1231 = vmatpush2.bf16.msra.mxu0 0
      %1232 = vmatprep.subr.bf16.mxu0 0
      %1233 = vmatpush2.bf16.msra.mxu0 0
      %1234 = vmatprep.subr.bf16.mxu0 0
      %1235 = vmatpush2.bf16.msra.mxu0 0
      %1236 = vmatprep.mubr.bf16.mxu0 0
      %1237 = vmatmul.mubr.bf16.gmra.mxu0 %v983
      %v1238 = vpop.f32.mrf.mxu0
      %v1239 = vadd.f32 0.0, %v1238
      %v1240 = vpop.f32.mrf.mxu0
      %v1241 = vpop.f32.mrf.mxu0
      %v1242 = vadd.f32 0.0, %v1241
      %v1243 = vpop.f32.mrf.mxu0
      %1244 = vmatprep.mubr.bf16.mxu0 0
      %1245 = vmatmul.mubr.bf16.gmra.mxu0 %v986
      %v1246 = vpop.f32.mrf.mxu0
      %v1247 = vadd.f32 0.0, %v1246
      %v1248 = vpop.f32.mrf.mxu0
      %v1249 = vpop.f32.mrf.mxu0
      %v1250 = vadd.f32 0.0, %v1249
      %v1251 = vpop.f32.mrf.mxu0
      %1252 = vmatprep.mubr.bf16.mxu0 0
      %1253 = vmatmul.mubr.bf16.gmra.mxu0 %v989
      %v1254 = vpop.f32.mrf.mxu0
      %v1255 = vadd.f32 0.0, %v1254
      %v1256 = vpop.f32.mrf.mxu0
      %v1257 = vpop.f32.mrf.mxu0
      %v1258 = vadd.f32 0.0, %v1257
      %v1259 = vpop.f32.mrf.mxu0
      %1260 = vmatprep.mubr.bf16.mxu0 0
      %1261 = vmatmul.mubr.bf16.gmra.mxu0 %v992
      %v1262 = vpop.f32.mrf.mxu0
      %v1263 = vadd.f32 0.0, %v1262
      %v1264 = vpop.f32.mrf.mxu0
      %v1265 = vpop.f32.mrf.mxu0
      %v1266 = vadd.f32 0.0, %v1265
      %v1267 = vpop.f32.mrf.mxu0
      %1268 = vmatprep.mubr.bf16.mxu0 0
      %1269 = vmatmul.mubr.bf16.gmra.mxu0 %v995
      %v1270 = vpop.f32.mrf.mxu0
      %v1271 = vadd.f32 0.0, %v1270
      %v1272 = vpop.f32.mrf.mxu0
      %v1273 = vpop.f32.mrf.mxu0
      %v1274 = vadd.f32 0.0, %v1273
      %v1275 = vpop.f32.mrf.mxu0
      %1276 = vmatprep.mubr.bf16.mxu0 0
      %1277 = vmatmul.mubr.bf16.gmra.mxu0 %v998
      %v1278 = vpop.f32.mrf.mxu0
      %v1279 = vadd.f32 0.0, %v1278
      %v1280 = vpop.f32.mrf.mxu0
      %v1281 = vpop.f32.mrf.mxu0
      %v1282 = vadd.f32 0.0, %v1281
      %v1283 = vpop.f32.mrf.mxu0
      %1284 = vmatprep.mubr.bf16.mxu0 0
      %1285 = vmatmul.mubr.bf16.gmra.mxu0 %v1001
      %v1286 = vpop.f32.mrf.mxu0
      %v1287 = vadd.f32 0.0, %v1286
      %v1288 = vpop.f32.mrf.mxu0
      %v1289 = vpop.f32.mrf.mxu0
      %v1290 = vadd.f32 0.0, %v1289
      %v1291 = vpop.f32.mrf.mxu0
      %1292 = vmatprep.mubr.bf16.mxu0 0
      %1293 = vmatmul.mubr.bf16.gmra.mxu0 %v1004
      %v1294 = vpop.f32.mrf.mxu0
      %v1295 = vadd.f32 0.0, %v1294
      %v1296 = vpop.f32.mrf.mxu0
      %v1297 = vpop.f32.mrf.mxu0
      %v1298 = vadd.f32 0.0, %v1297
      %v1299 = vpop.f32.mrf.mxu0
      %1300 = vmatprep.mubr.bf16.mxu0 0
      %1301 = vmatmul.mubr.bf16.gmra.mxu0 %v1007
      %v1302 = vpop.f32.mrf.mxu0
      %v1303 = vadd.f32 0.0, %v1302
      %v1304 = vpop.f32.mrf.mxu0
      %v1305 = vpop.f32.mrf.mxu0
      %v1306 = vadd.f32 0.0, %v1305
      %v1307 = vpop.f32.mrf.mxu0
      %1308 = vmatprep.mubr.bf16.mxu0 0
      %1309 = vmatmul.mubr.bf16.gmra.mxu0 %v1010
      %v1310 = vpop.f32.mrf.mxu0
      %v1311 = vadd.f32 0.0, %v1310
      %v1312 = vpop.f32.mrf.mxu0
      %v1313 = vpop.f32.mrf.mxu0
      %v1314 = vadd.f32 0.0, %v1313
      %v1315 = vpop.f32.mrf.mxu0
      %1316 = vmatprep.mubr.bf16.mxu0 0
      %1317 = vmatmul.mubr.bf16.gmra.mxu0 %v1013
      %v1318 = vpop.f32.mrf.mxu0
      %v1319 = vadd.f32 0.0, %v1318
      %v1320 = vpop.f32.mrf.mxu0
      %v1321 = vpop.f32.mrf.mxu0
      %v1322 = vadd.f32 0.0, %v1321
      %v1323 = vpop.f32.mrf.mxu0
      %1324 = vmatprep.mubr.bf16.mxu0 0
      %1325 = vmatmul.mubr.bf16.gmra.mxu0 %v1016
      %v1326 = vpop.f32.mrf.mxu0
      %v1327 = vadd.f32 0.0, %v1326
      %v1328 = vpop.f32.mrf.mxu0
      %v1329 = vpop.f32.mrf.mxu0
      %v1330 = vadd.f32 0.0, %v1329
      %v1331 = vpop.f32.mrf.mxu0
      %1332 = vmatprep.mubr.bf16.mxu0 0
      %1333 = vmatmul.mubr.bf16.gmra.mxu0 %v1019
      %v1334 = vpop.f32.mrf.mxu0
      %v1335 = vadd.f32 0.0, %v1334
      %v1336 = vpop.f32.mrf.mxu0
      %v1337 = vpop.f32.mrf.mxu0
      %v1338 = vadd.f32 0.0, %v1337
      %v1339 = vpop.f32.mrf.mxu0
      %1340 = vmatprep.mubr.bf16.mxu0 0
      %1341 = vmatmul.mubr.bf16.gmra.mxu0 %v1022
      %v1342 = vpop.f32.mrf.mxu0
      %v1343 = vadd.f32 0.0, %v1342
      %v1344 = vpop.f32.mrf.mxu0
      %v1345 = vpop.f32.mrf.mxu0
      %v1346 = vadd.f32 0.0, %v1345
      %v1347 = vpop.f32.mrf.mxu0
      %1348 = vmatprep.mubr.bf16.mxu0 0
      %1349 = vmatmul.mubr.bf16.gmra.mxu0 %v1025
      %v1350 = vpop.f32.mrf.mxu0
      %v1351 = vadd.f32 0.0, %v1350
      %v1352 = vpop.f32.mrf.mxu0
      %v1353 = vpop.f32.mrf.mxu0
      %v1354 = vadd.f32 0.0, %v1353
      %v1355 = vpop.f32.mrf.mxu0
      %1356 = vmatprep.mubr.bf16.mxu0 0
      %1357 = vmatmul.mubr.bf16.gmra.mxu0 %v1199
      %v1358 = vpop.f32.mrf.mxu0
      %v1359 = vadd.f32 0.0, %v1358
      %v1360 = vpop.f32.mrf.mxu0
      %v1361 = vpop.f32.mrf.mxu0
      %v1362 = vadd.f32 0.0, %v1361
      %v1363 = vpop.f32.mrf.mxu0
      %1364 = vdwg.mxu0
      %v1365 = vadd.f32 %v1065, %v1239
      %v1366 = vadd.f32 %v1068, %v1242
      %v1367 = vadd.f32 %v1073, %v1247
      %v1368 = vadd.f32 %v1076, %v1250
      %v1369 = vadd.f32 %v1081, %v1255
      %v1370 = vadd.f32 %v1084, %v1258
      %v1371 = vadd.f32 %v1089, %v1263
      %v1372 = vadd.f32 %v1092, %v1266
      %v1373 = vadd.f32 %v1097, %v1271
      %v1374 = vadd.f32 %v1100, %v1274
      %v1375 = vadd.f32 %v1105, %v1279
      %v1376 = vadd.f32 %v1108, %v1282
      %v1377 = vadd.f32 %v1113, %v1287
      %v1378 = vadd.f32 %v1116, %v1290
      %v1379 = vadd.f32 %v1121, %v1295
      %v1380 = vadd.f32 %v1124, %v1298
      %v1381 = vadd.f32 %v1129, %v1303
      %v1382 = vadd.f32 %v1132, %v1306
      %v1383 = vadd.f32 %v1137, %v1311
      %v1384 = vadd.f32 %v1140, %v1314
      %v1385 = vadd.f32 %v1145, %v1319
      %v1386 = vadd.f32 %v1148, %v1322
      %v1387 = vadd.f32 %v1153, %v1327
      %v1388 = vadd.f32 %v1156, %v1330
      %v1389 = vadd.f32 %v1161, %v1335
      %v1390 = vadd.f32 %v1164, %v1338
      %v1391 = vadd.f32 %v1169, %v1343
      %v1392 = vadd.f32 %v1172, %v1346
      %v1393 = vadd.f32 %v1177, %v1351
      %v1394 = vadd.f32 %v1180, %v1354
      %v1395 = vadd.f32 %v1185, %v1359
      %v1396 = vadd.f32 %v1188, %v1362
      %s1397 = scalar_lea.vmem %s1, 6
      %v1398 = vld [vmem:[%s1397] sm:$0x3]
      %v1399 = vunpack.c.l.b16 %v623
      %v1400 = vunpack.c.l.b16 %v633
      %v1401 = vpack.c.b16 %v1400, %v1399
      %v1403 = vsel %vm685, %v1401, 0
      %v1406 = vsel %vm734, %v1398, 0
      %1408 = vmatprep.subr.bf16.mxu0 0
      %1409 = vmatpush1.bf16.msra.mxu0 0
      %1410 = vmatprep.subr.bf16.mxu0 0
      %1411 = vmatpush1.bf16.msra.mxu0 0
      %1412 = vmatprep.subr.bf16.mxu0 0
      %1413 = vmatpush1.bf16.msra.mxu0 0
      %1414 = vmatprep.subr.bf16.mxu0 0
      %1415 = vmatpush1.bf16.msra.mxu0 0
      %1416 = vmatprep.subr.bf16.mxu0 0
      %1417 = vmatpush1.bf16.msra.mxu0 0
      %1418 = vmatprep.subr.bf16.mxu0 0
      %1419 = vmatpush1.bf16.msra.mxu0 0
      %1420 = vmatprep.subr.bf16.mxu0 0
      %1421 = vmatpush1.bf16.msra.mxu0 0
      %1422 = vmatprep.subr.bf16.mxu0 0
      %1423 = vmatpush1.bf16.msra.mxu0 %v1406
      %1424 = vmatprep.subr.bf16.mxu0 0
      %1425 = vmatpush2.bf16.msra.mxu0 0
      %1426 = vmatprep.subr.bf16.mxu0 0
      %1427 = vmatpush2.bf16.msra.mxu0 0
      %1428 = vmatprep.subr.bf16.mxu0 0
      %1429 = vmatpush2.bf16.msra.mxu0 0
      %1430 = vmatprep.subr.bf16.mxu0 0
      %1431 = vmatpush2.bf16.msra.mxu0 0
      %1432 = vmatprep.subr.bf16.mxu0 0
      %1433 = vmatpush2.bf16.msra.mxu0 0
      %1434 = vmatprep.subr.bf16.mxu0 0
      %1435 = vmatpush2.bf16.msra.mxu0 0
      %1436 = vmatprep.subr.bf16.mxu0 0
      %1437 = vmatpush2.bf16.msra.mxu0 0
      %1438 = vmatprep.subr.bf16.mxu0 0
      %1439 = vmatpush2.bf16.msra.mxu0 0
      %1440 = vmatprep.mubr.bf16.mxu0 0
      %1441 = vmatmul.mubr.bf16.gmra.mxu0 %v690
      %v1442 = vpop.f32.mrf.mxu0
      %v1443 = vadd.f32 0.0, %v1442
      %v1444 = vpop.f32.mrf.mxu0
      %v1445 = vpop.f32.mrf.mxu0
      %v1446 = vadd.f32 0.0, %v1445
      %v1447 = vpop.f32.mrf.mxu0
      %1448 = vmatprep.mubr.bf16.mxu0 0
      %1449 = vmatmul.mubr.bf16.gmra.mxu0 %v693
      %v1450 = vpop.f32.mrf.mxu0
      %v1451 = vadd.f32 0.0, %v1450
      %v1452 = vpop.f32.mrf.mxu0
      %v1453 = vpop.f32.mrf.mxu0
      %v1454 = vadd.f32 0.0, %v1453
      %v1455 = vpop.f32.mrf.mxu0
      %1456 = vmatprep.mubr.bf16.mxu0 0
      %1457 = vmatmul.mubr.bf16.gmra.mxu0 %v696
      %v1458 = vpop.f32.mrf.mxu0
      %v1459 = vadd.f32 0.0, %v1458
      %v1460 = vpop.f32.mrf.mxu0
      %v1461 = vpop.f32.mrf.mxu0
      %v1462 = vadd.f32 0.0, %v1461
      %v1463 = vpop.f32.mrf.mxu0
      %1464 = vmatprep.mubr.bf16.mxu0 0
      %1465 = vmatmul.mubr.bf16.gmra.mxu0 %v699
      %v1466 = vpop.f32.mrf.mxu0
      %v1467 = vadd.f32 0.0, %v1466
      %v1468 = vpop.f32.mrf.mxu0
      %v1469 = vpop.f32.mrf.mxu0
      %v1470 = vadd.f32 0.0, %v1469
      %v1471 = vpop.f32.mrf.mxu0
      %1472 = vmatprep.mubr.bf16.mxu0 0
      %1473 = vmatmul.mubr.bf16.gmra.mxu0 %v702
      %v1474 = vpop.f32.mrf.mxu0
      %v1475 = vadd.f32 0.0, %v1474
      %v1476 = vpop.f32.mrf.mxu0
      %v1477 = vpop.f32.mrf.mxu0
      %v1478 = vadd.f32 0.0, %v1477
      %v1479 = vpop.f32.mrf.mxu0
      %1480 = vmatprep.mubr.bf16.mxu0 0
      %1481 = vmatmul.mubr.bf16.gmra.mxu0 %v705
      %v1482 = vpop.f32.mrf.mxu0
      %v1483 = vadd.f32 0.0, %v1482
      %v1484 = vpop.f32.mrf.mxu0
      %v1485 = vpop.f32.mrf.mxu0
      %v1486 = vadd.f32 0.0, %v1485
      %v1487 = vpop.f32.mrf.mxu0
      %1488 = vmatprep.mubr.bf16.mxu0 0
      %1489 = vmatmul.mubr.bf16.gmra.mxu0 %v708
      %v1490 = vpop.f32.mrf.mxu0
      %v1491 = vadd.f32 0.0, %v1490
      %v1492 = vpop.f32.mrf.mxu0
      %v1493 = vpop.f32.mrf.mxu0
      %v1494 = vadd.f32 0.0, %v1493
      %v1495 = vpop.f32.mrf.mxu0
      %1496 = vmatprep.mubr.bf16.mxu0 0
      %1497 = vmatmul.mubr.bf16.gmra.mxu0 %v711
      %v1498 = vpop.f32.mrf.mxu0
      %v1499 = vadd.f32 0.0, %v1498
      %v1500 = vpop.f32.mrf.mxu0
      %v1501 = vpop.f32.mrf.mxu0
      %v1502 = vadd.f32 0.0, %v1501
      %v1503 = vpop.f32.mrf.mxu0
      %1504 = vmatprep.mubr.bf16.mxu0 0
      %1505 = vmatmul.mubr.bf16.gmra.mxu0 %v714
      %v1506 = vpop.f32.mrf.mxu0
      %v1507 = vadd.f32 0.0, %v1506
      %v1508 = vpop.f32.mrf.mxu0
      %v1509 = vpop.f32.mrf.mxu0
      %v1510 = vadd.f32 0.0, %v1509
      %v1511 = vpop.f32.mrf.mxu0
      %1512 = vmatprep.mubr.bf16.mxu0 0
      %1513 = vmatmul.mubr.bf16.gmra.mxu0 %v717
      %v1514 = vpop.f32.mrf.mxu0
      %v1515 = vadd.f32 0.0, %v1514
      %v1516 = vpop.f32.mrf.mxu0
      %v1517 = vpop.f32.mrf.mxu0
      %v1518 = vadd.f32 0.0, %v1517
      %v1519 = vpop.f32.mrf.mxu0
      %1520 = vmatprep.mubr.bf16.mxu0 0
      %1521 = vmatmul.mubr.bf16.gmra.mxu0 %v720
      %v1522 = vpop.f32.mrf.mxu0
      %v1523 = vadd.f32 0.0, %v1522
      %v1524 = vpop.f32.mrf.mxu0
      %v1525 = vpop.f32.mrf.mxu0
      %v1526 = vadd.f32 0.0, %v1525
      %v1527 = vpop.f32.mrf.mxu0
      %1528 = vmatprep.mubr.bf16.mxu0 0
      %1529 = vmatmul.mubr.bf16.gmra.mxu0 %v723
      %v1530 = vpop.f32.mrf.mxu0
      %v1531 = vadd.f32 0.0, %v1530
      %v1532 = vpop.f32.mrf.mxu0
      %v1533 = vpop.f32.mrf.mxu0
      %v1534 = vadd.f32 0.0, %v1533
      %v1535 = vpop.f32.mrf.mxu0
      %1536 = vmatprep.mubr.bf16.mxu0 0
      %1537 = vmatmul.mubr.bf16.gmra.mxu0 %v726
      %v1538 = vpop.f32.mrf.mxu0
      %v1539 = vadd.f32 0.0, %v1538
      %v1540 = vpop.f32.mrf.mxu0
      %v1541 = vpop.f32.mrf.mxu0
      %v1542 = vadd.f32 0.0, %v1541
      %v1543 = vpop.f32.mrf.mxu0
      %1544 = vmatprep.mubr.bf16.mxu0 0
      %1545 = vmatmul.mubr.bf16.gmra.mxu0 %v729
      %v1546 = vpop.f32.mrf.mxu0
      %v1547 = vadd.f32 0.0, %v1546
      %v1548 = vpop.f32.mrf.mxu0
      %v1549 = vpop.f32.mrf.mxu0
      %v1550 = vadd.f32 0.0, %v1549
      %v1551 = vpop.f32.mrf.mxu0
      %1552 = vmatprep.mubr.bf16.mxu0 0
      %1553 = vmatmul.mubr.bf16.gmra.mxu0 %v732
      %v1554 = vpop.f32.mrf.mxu0
      %v1555 = vadd.f32 0.0, %v1554
      %v1556 = vpop.f32.mrf.mxu0
      %v1557 = vpop.f32.mrf.mxu0
      %v1558 = vadd.f32 0.0, %v1557
      %v1559 = vpop.f32.mrf.mxu0
      %1560 = vmatprep.mubr.bf16.mxu0 0
      %1561 = vmatmul.mubr.bf16.gmra.mxu0 %v1403
      %v1562 = vpop.f32.mrf.mxu0
      %v1563 = vadd.f32 0.0, %v1562
      %v1564 = vpop.f32.mrf.mxu0
      %v1565 = vpop.f32.mrf.mxu0
      %v1566 = vadd.f32 0.0, %v1565
      %v1567 = vpop.f32.mrf.mxu0
      %1568 = vdwg.mxu0
      %v1569 = vadd.f32 %v1365, %v1443
      %v1570 = vadd.f32 %v1366, %v1446
      %v1571 = vadd.f32 %v1367, %v1451
      %v1572 = vadd.f32 %v1368, %v1454
      %v1573 = vadd.f32 %v1369, %v1459
      %v1574 = vadd.f32 %v1370, %v1462
      %v1575 = vadd.f32 %v1371, %v1467
      %v1576 = vadd.f32 %v1372, %v1470
      %v1577 = vadd.f32 %v1373, %v1475
      %v1578 = vadd.f32 %v1374, %v1478
      %v1579 = vadd.f32 %v1375, %v1483
      %v1580 = vadd.f32 %v1376, %v1486
      %v1581 = vadd.f32 %v1377, %v1491
      %v1582 = vadd.f32 %v1378, %v1494
      %v1583 = vadd.f32 %v1379, %v1499
      %v1584 = vadd.f32 %v1380, %v1502
      %v1585 = vadd.f32 %v1381, %v1507
      %v1586 = vadd.f32 %v1382, %v1510
      %v1587 = vadd.f32 %v1383, %v1515
      %v1588 = vadd.f32 %v1384, %v1518
      %v1589 = vadd.f32 %v1385, %v1523
      %v1590 = vadd.f32 %v1386, %v1526
      %v1591 = vadd.f32 %v1387, %v1531
      %v1592 = vadd.f32 %v1388, %v1534
      %v1593 = vadd.f32 %v1389, %v1539
      %v1594 = vadd.f32 %v1390, %v1542
      %v1595 = vadd.f32 %v1391, %v1547
      %v1596 = vadd.f32 %v1392, %v1550
      %v1597 = vadd.f32 %v1393, %v1555
      %v1598 = vadd.f32 %v1394, %v1558
      %v1599 = vadd.f32 %v1395, %v1563
      %v1600 = vadd.f32 %v1396, %v1566
      %vm1601 = vcmask 64512
      %v1602 = vsel %vm1601, %v1569, 0.0
      %v1603 = vsel %vm1601, %v1570, 0.0
      %v1604 = vadd.f32 %v1602, %v1603
      %v1605 = vsel %vm1601, %v1571, 0.0
      %v1606 = vadd.f32 %v1604, %v1605
      %v1607 = vsel %vm1601, %v1572, 0.0
      %v1608 = vadd.f32 %v1606, %v1607
      %v1609 = vsel %vm1601, %v1573, 0.0
      %v1610 = vadd.f32 %v1608, %v1609
      %v1611 = vsel %vm1601, %v1574, 0.0
      %v1612 = vadd.f32 %v1610, %v1611
      %v1613 = vsel %vm1601, %v1575, 0.0
      %v1614 = vadd.f32 %v1612, %v1613
      %v1615 = vsel %vm1601, %v1576, 0.0
      %v1616 = vadd.f32 %v1614, %v1615
      %v1617 = vsel %vm1601, %v1577, 0.0
      %v1618 = vadd.f32 %v1616, %v1617
      %v1619 = vsel %vm1601, %v1578, 0.0
      %v1620 = vadd.f32 %v1618, %v1619
      %v1621 = vsel %vm1601, %v1579, 0.0
      %v1622 = vadd.f32 %v1620, %v1621
      %v1623 = vsel %vm1601, %v1580, 0.0
      %v1624 = vadd.f32 %v1622, %v1623
      %v1625 = vsel %vm1601, %v1581, 0.0
      %v1626 = vadd.f32 %v1624, %v1625
      %v1627 = vsel %vm1601, %v1582, 0.0
      %v1628 = vadd.f32 %v1626, %v1627
      %v1629 = vsel %vm1601, %v1583, 0.0
      %v1630 = vadd.f32 %v1628, %v1629
      %v1631 = vsel %vm1601, %v1584, 0.0
      %v1632 = vadd.f32 %v1630, %v1631
      %v1633 = vsel %vm1601, %v1585, 0.0
      %v1634 = vadd.f32 %v1632, %v1633
      %v1635 = vsel %vm1601, %v1586, 0.0
      %v1636 = vadd.f32 %v1634, %v1635
      %v1637 = vsel %vm1601, %v1587, 0.0
      %v1638 = vadd.f32 %v1636, %v1637
      %v1639 = vsel %vm1601, %v1588, 0.0
      %v1640 = vadd.f32 %v1638, %v1639
      %v1641 = vsel %vm1601, %v1589, 0.0
      %v1642 = vadd.f32 %v1640, %v1641
      %v1643 = vsel %vm1601, %v1590, 0.0
      %v1644 = vadd.f32 %v1642, %v1643
      %v1645 = vsel %vm1601, %v1591, 0.0
      %v1646 = vadd.f32 %v1644, %v1645
      %v1647 = vsel %vm1601, %v1592, 0.0
      %v1648 = vadd.f32 %v1646, %v1647
      %v1649 = vsel %vm1601, %v1593, 0.0
      %v1650 = vadd.f32 %v1648, %v1649
      %v1651 = vsel %vm1601, %v1594, 0.0
      %v1652 = vadd.f32 %v1650, %v1651
      %v1653 = vsel %vm1601, %v1595, 0.0
      %v1654 = vadd.f32 %v1652, %v1653
      %v1655 = vsel %vm1601, %v1596, 0.0
      %v1656 = vadd.f32 %v1654, %v1655
      %v1657 = vsel %vm1601, %v1597, 0.0
      %v1658 = vadd.f32 %v1656, %v1657
      %v1659 = vsel %vm1601, %v1598, 0.0
      %v1660 = vadd.f32 %v1658, %v1659
      %v1661 = vsel %vm1601, %v1599, 0.0
      %v1662 = vadd.f32 %v1660, %v1661
      %v1663 = vsel %vm1601, %v1600, 0.0
      %v1664 = vadd.f32 %v1662, %v1663
      %v1665 = vrot.slane %v1664, 4
      %v1666 = vadd.f32 %v1664, %v1665
      %v1667 = vrot.slane %v1666, 2
      %v1668 = vadd.f32 %v1666, %v1667
      %v1669 = vrot.slane %v1668, 1
      %v1670 = vadd.f32 %v1668, %v1669
      %v1671 = vmul.f32 %v1569, %v1569
      %v1672 = vmul.f32 %v1570, %v1570
      %v1673 = vmul.f32 %v1571, %v1571
      %v1674 = vmul.f32 %v1572, %v1572
      %v1675 = vmul.f32 %v1573, %v1573
      %v1676 = vmul.f32 %v1574, %v1574
      %v1677 = vmul.f32 %v1575, %v1575
      %v1678 = vmul.f32 %v1576, %v1576
      %v1679 = vmul.f32 %v1577, %v1577
      %v1680 = vmul.f32 %v1578, %v1578
      %v1681 = vmul.f32 %v1579, %v1579
      %v1682 = vmul.f32 %v1580, %v1580
      %v1683 = vmul.f32 %v1581, %v1581
      %v1684 = vmul.f32 %v1582, %v1582
      %v1685 = vmul.f32 %v1583, %v1583
      %v1686 = vmul.f32 %v1584, %v1584
      %v1687 = vmul.f32 %v1585, %v1585
      %v1688 = vmul.f32 %v1586, %v1586
      %v1689 = vmul.f32 %v1587, %v1587
      %v1690 = vmul.f32 %v1588, %v1588
      %v1691 = vmul.f32 %v1589, %v1589
      %v1692 = vmul.f32 %v1590, %v1590
      %v1693 = vmul.f32 %v1591, %v1591
      %v1694 = vmul.f32 %v1592, %v1592
      %v1695 = vmul.f32 %v1593, %v1593
      %v1696 = vmul.f32 %v1594, %v1594
      %v1697 = vmul.f32 %v1595, %v1595
      %v1698 = vmul.f32 %v1596, %v1596
      %v1699 = vmul.f32 %v1597, %v1597
      %v1700 = vmul.f32 %v1598, %v1598
      %v1701 = vmul.f32 %v1599, %v1599
      %v1702 = vmul.f32 %v1600, %v1600
      %v1703 = vsel %vm1601, %v1671, 0.0
      %v1704 = vsel %vm1601, %v1672, 0.0
      %v1705 = vadd.f32 %v1703, %v1704
      %v1706 = vsel %vm1601, %v1673, 0.0
      %v1707 = vadd.f32 %v1705, %v1706
      %v1708 = vsel %vm1601, %v1674, 0.0
      %v1709 = vadd.f32 %v1707, %v1708
      %v1710 = vsel %vm1601, %v1675, 0.0
      %v1711 = vadd.f32 %v1709, %v1710
      %v1712 = vsel %vm1601, %v1676, 0.0
      %v1713 = vadd.f32 %v1711, %v1712
      %v1714 = vsel %vm1601, %v1677, 0.0
      %v1715 = vadd.f32 %v1713, %v1714
      %v1716 = vsel %vm1601, %v1678, 0.0
      %v1717 = vadd.f32 %v1715, %v1716
      %v1718 = vsel %vm1601, %v1679, 0.0
      %v1719 = vadd.f32 %v1717, %v1718
      %v1720 = vsel %vm1601, %v1680, 0.0
      %v1721 = vadd.f32 %v1719, %v1720
      %v1722 = vsel %vm1601, %v1681, 0.0
      %v1723 = vadd.f32 %v1721, %v1722
      %v1724 = vsel %vm1601, %v1682, 0.0
      %v1725 = vadd.f32 %v1723, %v1724
      %v1726 = vsel %vm1601, %v1683, 0.0
      %v1727 = vadd.f32 %v1725, %v1726
      %v1728 = vsel %vm1601, %v1684, 0.0
      %v1729 = vadd.f32 %v1727, %v1728
      %v1730 = vsel %vm1601, %v1685, 0.0
      %v1731 = vadd.f32 %v1729, %v1730
      %v1732 = vsel %vm1601, %v1686, 0.0
      %v1733 = vadd.f32 %v1731, %v1732
      %v1734 = vsel %vm1601, %v1687, 0.0
      %v1735 = vadd.f32 %v1733, %v1734
      %v1736 = vsel %vm1601, %v1688, 0.0
      %v1737 = vadd.f32 %v1735, %v1736
      %v1738 = vsel %vm1601, %v1689, 0.0
      %v1739 = vadd.f32 %v1737, %v1738
      %v1740 = vsel %vm1601, %v1690, 0.0
      %v1741 = vadd.f32 %v1739, %v1740
      %v1742 = vsel %vm1601, %v1691, 0.0
      %v1743 = vadd.f32 %v1741, %v1742
      %v1744 = vsel %vm1601, %v1692, 0.0
      %v1745 = vadd.f32 %v1743, %v1744
      %v1746 = vsel %vm1601, %v1693, 0.0
      %v1747 = vadd.f32 %v1745, %v1746
      %v1748 = vsel %vm1601, %v1694, 0.0
      %v1749 = vadd.f32 %v1747, %v1748
      %v1750 = vsel %vm1601, %v1695, 0.0
      %v1751 = vadd.f32 %v1749, %v1750
      %v1752 = vsel %vm1601, %v1696, 0.0
      %v1753 = vadd.f32 %v1751, %v1752
      %v1754 = vsel %vm1601, %v1697, 0.0
      %v1755 = vadd.f32 %v1753, %v1754
      %v1756 = vsel %vm1601, %v1698, 0.0
      %v1757 = vadd.f32 %v1755, %v1756
      %v1758 = vsel %vm1601, %v1699, 0.0
      %v1759 = vadd.f32 %v1757, %v1758
      %v1760 = vsel %vm1601, %v1700, 0.0
      %v1761 = vadd.f32 %v1759, %v1760
      %v1762 = vsel %vm1601, %v1701, 0.0
      %v1763 = vadd.f32 %v1761, %v1762
      %v1764 = vsel %vm1601, %v1702, 0.0
      %v1765 = vadd.f32 %v1763, %v1764
      %v1766 = vrot.slane %v1765, 4
      %v1767 = vadd.f32 %v1765, %v1766
      %v1768 = vrot.slane %v1767, 2
      %v1769 = vadd.f32 %v1767, %v1768
      %v1770 = vrot.slane %v1769, 1
      %v1771 = vadd.f32 %v1769, %v1770
      %1773 = vrot.lane.b32.xlu0 %v1670, 126
      %v1774 = vpop.permute.xlu0 %1773
      %v1776 = vadd.f32 %v1670, %v1774
      %1777 = vrot.lane.b32.xlu0 %v1670, 124
      %v1778 = vpop.permute.xlu0 %1777
      %v1780 = vadd.f32 %v1776, %v1778
      %1781 = vrot.lane.b32.xlu0 %v1670, 122
      %v1782 = vpop.permute.xlu0 %1781
      %v1784 = vadd.f32 %v1780, %v1782
      %v1785 = vrcp.pop 1024.0
      %v1786 = vmul.f32 %v1784, %v1785
      %1788 = vrot.lane.b32.xlu0 %v1771, 126
      %v1789 = vpop.permute.xlu0 %1788
      %v1791 = vadd.f32 %v1771, %v1789
      %1792 = vrot.lane.b32.xlu0 %v1771, 124
      %v1793 = vpop.permute.xlu0 %1792
      %v1795 = vadd.f32 %v1791, %v1793
      %1796 = vrot.lane.b32.xlu0 %v1771, 122
      %v1797 = vpop.permute.xlu0 %1796
      %v1799 = vadd.f32 %v1795, %v1797
      %v1800 = vmul.f32 %v1799, %v1785
      %v1801 = vmul.f32 %v1786, %v1786
      %v1802 = vsub.f32 %v1800, %v1801
      %v1803 = vadd.f32 %v1802, 1e-05
      %v1804 = vrsqrt.pop %v1803
      %1806 = vrot.lane.b32.xlu0 %v1786, 2
      %v1807 = vpop.permute.xlu0 %1806
      %1809 = vrot.lane.b32.xlu0 %v1786, 4
      %v1810 = vpop.permute.xlu0 %1809
      %1812 = vrot.lane.b32.xlu0 %v1786, 6
      %v1813 = vpop.permute.xlu0 %1812
      %vm1815 = vcmask 15360
      %v1816 = vsel %vm1815, %v1786, %v1807
      %v1817 = vsel %vm685, %v1816, %v1810
      %vm1818 = vcmask 48128
      %v1819 = vsel %vm1818, %v1817, %v1813
      %1821 = vrot.lane.b32.xlu0 %v1804, 2
      %v1822 = vpop.permute.xlu0 %1821
      %1824 = vrot.lane.b32.xlu0 %v1804, 4
      %v1825 = vpop.permute.xlu0 %1824
      %1827 = vrot.lane.b32.xlu0 %v1804, 6
      %v1828 = vpop.permute.xlu0 %1827
      %v1830 = vsel %vm1815, %v1804, %v1822
      %v1831 = vsel %vm685, %v1830, %v1825
      %v1832 = vsel %vm1818, %v1831, %v1828
      %v1833 = vlaneseq
      %v1834 = vshrl.u32 %v1833, 7
      %v1835 = vsub.s32 0, %v1834
      %v1836 = vrot.slane %v1819, %v1835
      %v1837 = vsub.f32 %v1569, %v1836
      %v1838 = vsub.f32 %v1570, %v1836
      %v1839 = vsub.f32 %v1571, %v1836
      %v1840 = vsub.f32 %v1572, %v1836
      %v1841 = vsub.f32 %v1573, %v1836
      %v1842 = vsub.f32 %v1574, %v1836
      %v1843 = vsub.f32 %v1575, %v1836
      %v1844 = vsub.f32 %v1576, %v1836
      %v1845 = vsub.f32 %v1577, %v1836
      %v1846 = vsub.f32 %v1578, %v1836
      %v1847 = vsub.f32 %v1579, %v1836
      %v1848 = vsub.f32 %v1580, %v1836
      %v1849 = vsub.f32 %v1581, %v1836
      %v1850 = vsub.f32 %v1582, %v1836
      %v1851 = vsub.f32 %v1583, %v1836
      %v1852 = vsub.f32 %v1584, %v1836
      %v1853 = vsub.f32 %v1585, %v1836
      %v1854 = vsub.f32 %v1586, %v1836
      %v1855 = vsub.f32 %v1587, %v1836
      %v1856 = vsub.f32 %v1588, %v1836
      %v1857 = vsub.f32 %v1589, %v1836
      %v1858 = vsub.f32 %v1590, %v1836
      %v1859 = vsub.f32 %v1591, %v1836
      %v1860 = vsub.f32 %v1592, %v1836
      %v1861 = vsub.f32 %v1593, %v1836
      %v1862 = vsub.f32 %v1594, %v1836
      %v1863 = vsub.f32 %v1595, %v1836
      %v1864 = vsub.f32 %v1596, %v1836
      %v1865 = vsub.f32 %v1597, %v1836
      %v1866 = vsub.f32 %v1598, %v1836
      %v1867 = vsub.f32 %v1599, %v1836
      %v1868 = vsub.f32 %v1600, %v1836
      %v1869 = vlaneseq
      %v1870 = vshrl.u32 %v1869, 7
      %v1871 = vsub.s32 0, %v1870
      %v1872 = vrot.slane %v1832, %v1871
      %v1873 = vmul.f32 %v1837, %v1872
      %v1874 = vmul.f32 %v1838, %v1872
      %v1875 = vmul.f32 %v1839, %v1872
      %v1876 = vmul.f32 %v1840, %v1872
      %v1877 = vmul.f32 %v1841, %v1872
      %v1878 = vmul.f32 %v1842, %v1872
      %v1879 = vmul.f32 %v1843, %v1872
      %v1880 = vmul.f32 %v1844, %v1872
      %v1881 = vmul.f32 %v1845, %v1872
      %v1882 = vmul.f32 %v1846, %v1872
      %v1883 = vmul.f32 %v1847, %v1872
      %v1884 = vmul.f32 %v1848, %v1872
      %v1885 = vmul.f32 %v1849, %v1872
      %v1886 = vmul.f32 %v1850, %v1872
      %v1887 = vmul.f32 %v1851, %v1872
      %v1888 = vmul.f32 %v1852, %v1872
      %v1889 = vmul.f32 %v1853, %v1872
      %v1890 = vmul.f32 %v1854, %v1872
      %v1891 = vmul.f32 %v1855, %v1872
      %v1892 = vmul.f32 %v1856, %v1872
      %v1893 = vmul.f32 %v1857, %v1872
      %v1894 = vmul.f32 %v1858, %v1872
      %v1895 = vmul.f32 %v1859, %v1872
      %v1896 = vmul.f32 %v1860, %v1872
      %v1897 = vmul.f32 %v1861, %v1872
      %v1898 = vmul.f32 %v1862, %v1872
      %v1899 = vmul.f32 %v1863, %v1872
      %v1900 = vmul.f32 %v1864, %v1872
      %v1901 = vmul.f32 %v1865, %v1872
      %v1902 = vmul.f32 %v1866, %v1872
      %v1903 = vmul.f32 %v1867, %v1872
      %v1904 = vmul.f32 %v1868, %v1872
      %v1905 = vmax.f32 %v1873, 0.0
      %v1906 = vmax.f32 %v1874, 0.0
      %v1907 = vmax.f32 %v1875, 0.0
      %v1908 = vmax.f32 %v1876, 0.0
      %v1909 = vmax.f32 %v1877, 0.0
      %v1910 = vmax.f32 %v1878, 0.0
      %v1911 = vmax.f32 %v1879, 0.0
      %v1912 = vmax.f32 %v1880, 0.0
      %v1913 = vmax.f32 %v1881, 0.0
      %v1914 = vmax.f32 %v1882, 0.0
      %v1915 = vmax.f32 %v1883, 0.0
      %v1916 = vmax.f32 %v1884, 0.0
      %v1917 = vmax.f32 %v1885, 0.0
      %v1918 = vmax.f32 %v1886, 0.0
      %v1919 = vmax.f32 %v1887, 0.0
      %v1920 = vmax.f32 %v1888, 0.0
      %v1921 = vmax.f32 %v1889, 0.0
      %v1922 = vmax.f32 %v1890, 0.0
      %v1923 = vmax.f32 %v1891, 0.0
      %v1924 = vmax.f32 %v1892, 0.0
      %v1925 = vmax.f32 %v1893, 0.0
      %v1926 = vmax.f32 %v1894, 0.0
      %v1927 = vmax.f32 %v1895, 0.0
      %v1928 = vmax.f32 %v1896, 0.0
      %v1929 = vmax.f32 %v1897, 0.0
      %v1930 = vmax.f32 %v1898, 0.0
      %v1931 = vmax.f32 %v1899, 0.0
      %v1932 = vmax.f32 %v1900, 0.0
      %v1933 = vmax.f32 %v1901, 0.0
      %v1934 = vmax.f32 %v1902, 0.0
      %v1935 = vmax.f32 %v1903, 0.0
      %v1936 = vmax.f32 %v1904, 0.0
      %1937 = vst.msk [vmem:[%s170] sm:$0xff] %vm1601, %v1905
      %1938 = vst.msk [vmem:[%s170 + $0x8] sm:$0xff] %vm1601, %v1906
      %1939 = vst.msk [vmem:[%s170 + $0x10] sm:$0xff] %vm1601, %v1907
      %1940 = vst.msk [vmem:[%s170 + $0x18] sm:$0xff] %vm1601, %v1908
      %1941 = vst.msk [vmem:[%s170 + $0x20] sm:$0xff] %vm1601, %v1909
      %1942 = vst.msk [vmem:[%s170 + $0x28] sm:$0xff] %vm1601, %v1910
      %1943 = vst.msk [vmem:[%s170 + $0x30] sm:$0xff] %vm1601, %v1911
      %1944 = vst.msk [vmem:[%s170 + $0x38] sm:$0xff] %vm1601, %v1912
      %1945 = vst.msk [vmem:[%s170 + $0x40] sm:$0xff] %vm1601, %v1913
      %1946 = vst.msk [vmem:[%s170 + $0x48] sm:$0xff] %vm1601, %v1914
      %1947 = vst.msk [vmem:[%s170 + $0x50] sm:$0xff] %vm1601, %v1915
      %1948 = vst.msk [vmem:[%s170 + $0x58] sm:$0xff] %vm1601, %v1916
      %1949 = vst.msk [vmem:[%s170 + $0x60] sm:$0xff] %vm1601, %v1917
      %1950 = vst.msk [vmem:[%s170 + $0x68] sm:$0xff] %vm1601, %v1918
      %1951 = vst.msk [vmem:[%s170 + $0x70] sm:$0xff] %vm1601, %v1919
      %1952 = vst.msk [vmem:[%s170 + $0x78] sm:$0xff] %vm1601, %v1920
      %1953 = vst.msk [vmem:[%s170 + $0x80] sm:$0xff] %vm1601, %v1921
      %1954 = vst.msk [vmem:[%s170 + $0x88] sm:$0xff] %vm1601, %v1922
      %1955 = vst.msk [vmem:[%s170 + $0x90] sm:$0xff] %vm1601, %v1923
      %1956 = vst.msk [vmem:[%s170 + $0x98] sm:$0xff] %vm1601, %v1924
      %1957 = vst.msk [vmem:[%s170 + $0xa0] sm:$0xff] %vm1601, %v1925
      %1958 = vst.msk [vmem:[%s170 + $0xa8] sm:$0xff] %vm1601, %v1926
      %1959 = vst.msk [vmem:[%s170 + $0xb0] sm:$0xff] %vm1601, %v1927
      %1960 = vst.msk [vmem:[%s170 + $0xb8] sm:$0xff] %vm1601, %v1928
      %1961 = vst.msk [vmem:[%s170 + $0xc0] sm:$0xff] %vm1601, %v1929
      %1962 = vst.msk [vmem:[%s170 + $0xc8] sm:$0xff] %vm1601, %v1930
      %1963 = vst.msk [vmem:[%s170 + $0xd0] sm:$0xff] %vm1601, %v1931
      %1964 = vst.msk [vmem:[%s170 + $0xd8] sm:$0xff] %vm1601, %v1932
      %1965 = vst.msk [vmem:[%s170 + $0xe0] sm:$0xff] %vm1601, %v1933
      %1966 = vst.msk [vmem:[%s170 + $0xe8] sm:$0xff] %vm1601, %v1934
      %1967 = vst.msk [vmem:[%s170 + $0xf0] sm:$0xff] %vm1601, %v1935
      %1968 = vst.msk [vmem:[%s170 + $0xf8] sm:$0xff] %vm1601, %v1936
      %p1969 = scmp.lt.s32.totalorder %s14, 1
      %s1970 = scalar_select %p1969, %s14, 1
      %s1971 = smul.addr %s1970, 32
      %s1972 = smul.addr %s1971, 8
      %s1973 = scalar_lea.vmem %s3, %s1972
      // Predicated region
      $region33: #{tpu_custom_call.1} parent=31 // pred_check
        %p1974 = pneg %p100
      $region34: #{tpu_custom_call.1} parent=31 // pred_check_branch
        %1976 = sbr.rel (%p1974) target = $region36
      $region35: #{tpu_custom_call.1} parent=31 // pred_region
        _
      $region36: #{tpu_custom_call.1} parent=31 // pred_fallthru
        _
    $region32: #{tpu_custom_call.1} parent=5 // pred_fallthru
      _
    %p1977 = scmp.le.s32.totalorder 2, %s9
    // Predicated region
    $region37: #{tpu_custom_call.1} parent=5 // pred_check
      %p1978 = pneg %p1977
    $region38: #{tpu_custom_call.1} parent=5 // pred_check_branch
      %1980 = sbr.rel (%p1978) target = $region40
    $region39: #{tpu_custom_call.1} parent=5 // pred_region
      %s1981 = ssub.s32 %s9, 2
      // Predicated region
      $region41: #{tpu_custom_call.1} parent=39 // pred_check
        %p1982 = pneg %p106
      $region42: #{tpu_custom_call.1} parent=39 // pred_check_branch
        %1984 = sbr.rel (%p1982) target = $region44
      $region43: #{tpu_custom_call.1} parent=39 // pred_region
        %p1985 = scmp.lt.s32.totalorder %s15, 1
        %s1986 = scalar_select %p1985, %s15, 1
        %s1987 = smul.addr %s1986, 32
        %s1988 = smul.addr %s1987, 8
        %s1989 = scalar_lea.vmem %s3, %s1988
      $region44: #{tpu_custom_call.1} parent=39 // pred_fallthru
        _
    $region40: #{tpu_custom_call.1} parent=5 // pred_fallthru
      _
  $region6: #{tpu_custom_call.1} parent=0 // loop_footer
    %s13 = sadd.s32 1, %s9
  $region7: #{tpu_custom_call.1} parent=0 // loop_footer_branch
    %8 = sbr.rel target = $region3
  $region8: #{tpu_custom_call.1} parent=0 // loop_exit
    _

</llo_original>
